<compile_context>
chip_gen: v5e
topology: v5e:2x2
jax: 0.10.0
libtpu: 0.0.40
codegen_flags: <defaults>
</compile_context>

<pallas_src>
import functools

import jax
import jax.numpy as jnp
from jax.experimental import pallas as pl
from jax.experimental.pallas import tpu as pltpu


# ------------------------------ fused kernel ------------------------------- #

def _shuffle_unit_kernel(*refs, stride, tr, mid, hsc, rc, downsample,
                         add_residual):
    if downsample:
        (x_ref, w1_ref, s1_ref, t1_ref, wdw_ref, sdw_ref, tdw_ref,
         w2_ref, s2_ref, t2_ref, wsc_ref, tsc_ref, o_ref, pad_ref) = refs
    else:
        (x_ref, w1_ref, s1_ref, t1_ref, wdw_ref, sdw_ref, tdw_ref,
         w2_ref, s2_ref, t2_ref, o_ref, pad_ref) = refs
        wsc_ref = tsc_ref = None

    f32 = jnp.float32
    h, w, cin = x_ref.shape            # full image (revisited across row tiles)
    tro = tr // stride                 # output rows produced by this tile
    wo = w // stride                   # output cols
    r = pl.program_id(1)
    row0 = r * tr                      # first input row of this tile

    w1 = w1_ref[...]
    s1 = s1_ref[...]
    t1 = t1_ref[...]

    def pw1(rows):
        """primary_conv on (k, w, cin) rows: 1x1 conv (bf16 MXU) + BN + ReLU."""
        k = rows.shape[0]
        y = jnp.dot(rows.reshape(k * w, cin).astype(jnp.bfloat16), w1,
                    preferred_element_type=f32)
        y = jnp.maximum(y * s1 + t1, 0.0)
        return y.reshape(k, w, mid)

    # ---- stage 1: primary_conv into a zero-padded VMEM tile.  Image borders
    #      stay zero (= the dw conv's padding=1); tile-boundary halo rows are
    #      recomputed (2 extra rows of a tiny matmul per tile).
    pad_ref[...] = jnp.zeros_like(pad_ref)
    xc = x_ref[pl.ds(row0, tr), :, :]                      # (tr, w, cin)
    prim = pw1(xc)
    pad_ref[1:tr + 1, 1:w + 1, :] = prim

    @pl.when(r > 0)
    def _top_halo():
        pad_ref[0:1, 1:w + 1, :] = pw1(x_ref[pl.ds(row0 - 1, 1), :, :])

    @pl.when(r < pl.num_programs(1) - 1)
    def _bottom_halo():
        pad_ref[tr + 1:tr + 2, 1:w + 1, :] = pw1(x_ref[pl.ds(row0 + tr, 1), :, :])

    # ---- stage 2: depthwise 3x3 (+ BN) from 9 shifted reads of the padded
    #      VMEM tile (no im2col, no extra HBM traffic).
    acc = jnp.zeros((tro, wo, mid), f32)
    for k in range(9):
        kh, kw = divmod(k, 3)
        if stride == 1:
            tap = pad_ref[kh:kh + tro, kw:kw + wo, :]
        else:
            tap = pad_ref[pl.ds(kh, tro, stride=stride),
                          pl.ds(kw, wo, stride=stride), :]
        acc = acc + tap * wdw_ref[k]
    dwn = acc * sdw_ref[...] + tdw_ref[...]

    # ---- stage 3: residual 1x1 conv + BN + ReLU (bf16 MXU, f32 epilogue).
    res = jnp.dot(dwn.reshape(tro * wo, mid).astype(jnp.bfloat16), w2_ref[...],
                  preferred_element_type=f32)
    res = jnp.maximum(res * s2_ref[...] + t2_ref[...], 0.0).reshape(tro, wo, rc)

    # ---- shortcut branch.
    if downsample:
        # AvgPool2d(2,2) over `prim`, read back from the padded tile, then the
        # (BN + 1x1 conv) with the BN folded into wsc/tsc.
        sp = (pad_ref[pl.ds(1, tro, stride=2), pl.ds(1, wo, stride=2), :]
              + pad_ref[pl.ds(1, tro, stride=2), pl.ds(2, wo, stride=2), :]
              + pad_ref[pl.ds(2, tro, stride=2), pl.ds(1, wo, stride=2), :]
              + pad_ref[pl.ds(2, tro, stride=2), pl.ds(2, wo, stride=2), :]) * 0.25
        sc = jnp.dot(sp.reshape(tro * wo, mid).astype(jnp.bfloat16), wsc_ref[...],
                     preferred_element_type=f32) + tsc_ref[...]
        sc = sc.reshape(tro, wo, hsc)
    else:
        sc = prim                                          # identity shortcut

    # ---- tail: concat([shortcut, residual]) (+ residual add with the input).
    #      The groups=2 channel shuffle is folded into the boundary transpose
    #      outside the kernel, where it is free.
    o_ref[:, :, 0:hsc] = sc.astype(o_ref.dtype)
    o_ref[:, :, hsc:hsc + rc] = res.astype(o_ref.dtype)
    if add_residual:
        o_ref[...] = o_ref[...] + xc.astype(o_ref.dtype)


# --------------------------- parameter handling ----------------------------- #

def bn_fold(gamma, beta, mean, var, conv_bias=None, eps=1e-5):
    """Fold (conv bias +) inference BatchNorm into y = scale * conv + shift."""
    scale = gamma / jnp.sqrt(var + eps)
    shift = beta - mean * scale
    if conv_bias is not None:
        shift = shift + conv_bias * scale
    return scale, shift


def init_params(key, in_channels, out_channels, stride):
    mid = in_channels // 2
    oc2 = out_channels // 2
    downsample = (stride != 1) or (in_channels != out_channels)
    ks = jax.random.split(key, 24)

    def nrm(k, shape, s=0.1):
        return s * jax.random.normal(k, shape, jnp.float32)

    def pos(k, shape):
        return 0.5 + jax.random.uniform(k, shape, jnp.float32)

    p = {}
    # primary_conv: 1x1 (in -> mid) + BN
    p["w1"] = nrm(ks[0], (in_channels, mid))
    p["b1"] = nrm(ks[1], (mid,))
    p["bn1"] = (pos(ks[2], (mid,)), nrm(ks[3], (mid,)), nrm(ks[4], (mid,)), pos(ks[5], (mid,)))
    # residual depthwise 3x3 (groups = mid) + BN
    p["wdw"] = nrm(ks[6], (9, mid))
    p["bdw"] = nrm(ks[7], (mid,))
    p["bndw"] = (pos(ks[8], (mid,)), nrm(ks[9], (mid,)), nrm(ks[10], (mid,)), pos(ks[11], (mid,)))
    # residual 1x1 (mid -> oc2 or mid) + BN
    rc = oc2 if downsample else mid
    p["w2"] = nrm(ks[12], (mid, rc))
    p["b2"] = nrm(ks[13], (rc,))
    p["bn2"] = (pos(ks[14], (rc,)), nrm(ks[15], (rc,)), nrm(ks[16], (rc,)), pos(ks[17], (rc,)))
    if downsample:
        # shortcut: AvgPool2d(2,2) + BN(mid) + 1x1 (mid -> oc2)
        p["bnsc"] = (pos(ks[18], (mid,)), nrm(ks[19], (mid,)), nrm(ks[20], (mid,)), pos(ks[21], (mid,)))
        p["wsc"] = nrm(ks[22], (mid, oc2))
        p["bsc"] = nrm(ks[23], (oc2,))
    return p


# ------------------------------ forward pass -------------------------------- #

def _pick_row_tile(n, h, w, stride):
    # Biggest row tile that keeps the fused matmuls around <= 2048 rows while
    # still giving >= 2 total grid steps (so both v7x TensorCores get work).
    divisors = [d for d in range(h, 0, -1) if h % d == 0 and d % stride == 0]
    for d in divisors:
        if d * w <= 2048 and n * (h // d) >= 2:
            return d
    return divisors[-1] if divisors else h


def _bcast_spec(shape):
    return pl.BlockSpec(shape, lambda nn, rr: (0,) * len(shape))


def shuffle_unit(x_nchw, params, *, in_channels, out_channels, stride,
                 row_tile=None):
    """ShuffleUnit forward (NCHW in / NCHW out, matching the PyTorch module).

    BatchNorm runs in inference mode (running-stats affine folded into the
    kernel epilogues).
    """
    assert stride in (1, 2), "ShuffleUnit supports stride 1 or 2"
    downsample = (stride != 1) or (in_channels != out_channels)
    if downsample:
        # The module's AvgPool2d(2,2) shortcut only lines up with the residual
        # branch when the downsample stride is 2 (same as the PyTorch module).
        assert stride == 2
    n, c, h, w = x_nchw.shape
    assert c == in_channels
    assert h % stride == 0 and w % stride == 0
    mid = in_channels // 2
    rc = out_channels // 2 if downsample else mid      # residual-branch width
    hsc = out_channels // 2 if downsample else mid     # shortcut-branch width
    cout = hsc + rc
    ho, wo = h // stride, w // stride

    tr = row_tile if row_tile is not None else _pick_row_tile(n, h, w, stride)
    assert h % tr == 0 and tr % stride == 0
    r_steps = h // tr
    tro = tr // stride

    # NCHW -> NHWC so channels sit on TPU lanes and the 1x1 convs are matmuls.
    # TODO(synk): in a full network keep activations NHWC end-to-end so this
    # transpose (and the one below) happens once at the model boundary.
    x = jnp.transpose(x_nchw, (0, 2, 3, 1))

    s1, t1 = bn_fold(*params["bn1"], conv_bias=params["b1"])
    sdw, tdw = bn_fold(*params["bndw"], conv_bias=params["bdw"])
    s2, t2 = bn_fold(*params["bn2"], conv_bias=params["b2"])

    operands = [
        x,
        params["w1"].astype(jnp.bfloat16), s1.reshape(1, mid), t1.reshape(1, mid),
        params["wdw"], sdw.reshape(1, mid), tdw.reshape(1, mid),
        params["w2"].astype(jnp.bfloat16), s2.reshape(1, rc), t2.reshape(1, rc),
    ]
    in_specs = [
        pl.BlockSpec((None, h, w, c), lambda nn, rr: (nn, 0, 0, 0)),
        _bcast_spec((c, mid)), _bcast_spec((1, mid)), _bcast_spec((1, mid)),
        _bcast_spec((9, mid)), _bcast_spec((1, mid)), _bcast_spec((1, mid)),
        _bcast_spec((mid, rc)), _bcast_spec((1, rc)), _bcast_spec((1, rc)),
    ]
    if downsample:
        # Fold the shortcut's BN (which sits *before* its 1x1 conv) into the
        # conv weights/bias.
        sbn, tbn = bn_fold(*params["bnsc"])
        wsc = (params["wsc"] * sbn[:, None]).astype(jnp.bfloat16)
        tsc = (tbn @ params["wsc"] + params["bsc"]).reshape(1, hsc)
        operands += [wsc, tsc]
        in_specs += [_bcast_spec((mid, hsc)), _bcast_spec((1, hsc))]

    kernel = functools.partial(
        _shuffle_unit_kernel, stride=stride, tr=tr, mid=mid, hsc=hsc, rc=rc,
        downsample=downsample, add_residual=not downsample)

    out_nhwc = pl.pallas_call(
        kernel,
        out_shape=jax.ShapeDtypeStruct((n, ho, wo, cout), x.dtype),
        grid=(n, r_steps),
        in_specs=in_specs,
        out_specs=pl.BlockSpec((None, tro, wo, cout),
                               lambda nn, rr: (nn, rr, 0, 0)),
        scratch_shapes=[pltpu.VMEM((tr + 2, w + 2, mid), jnp.float32)],
        compiler_params=pltpu.CompilerParams(
            dimension_semantics=("parallel", "parallel")),
    )(*operands)

    # channel_shuffle(groups=2) folded into the single NHWC->NCHW boundary
    # transpose: NCHW output channel 2*i = shortcut_i, 2*i + 1 = residual_i.
    half = cout // 2
    y = out_nhwc.reshape(n, ho, wo, 2, half)
    return jnp.transpose(y, (0, 4, 3, 1, 2)).reshape(n, cout, ho, wo)


# -------------------------- pure-JAX reference ------------------------------ #

def _bn_ref(z, gamma, beta, mean, var, eps=1e-5):
    inv = gamma / jnp.sqrt(var + eps)
    return z * inv[None, :, None, None] + (beta - mean * inv)[None, :, None, None]


def shuffle_unit_reference(x, params, *, in_channels, out_channels, stride):
    """Pure-JAX/XLA reference that mirrors the PyTorch module (NCHW)."""
    dn = ("NCHW", "OIHW", "NCHW")
    hp = jax.lax.Precision.HIGHEST
    mid = in_channels // 2
    downsample = (stride != 1) or (in_channels != out_channels)

    def conv1x1(z, w_cin_cout, bias):
        w4 = jnp.transpose(w_cin_cout, (1, 0))[:, :, None, None]
        z = jax.lax.conv_general_dilated(z, w4, (1, 1), "VALID",
                                         dimension_numbers=dn, precision=hp)
        return z + bias[None, :, None, None]

    # primary_conv
    p = conv1x1(x, params["w1"], params["b1"])
    p = jnp.maximum(_bn_ref(p, *params["bn1"]), 0.0)

    # residual branch
    wdw = jnp.transpose(params["wdw"], (1, 0)).reshape(mid, 1, 3, 3)
    r = jax.lax.conv_general_dilated(p, wdw, (stride, stride), [(1, 1), (1, 1)],
                                     dimension_numbers=dn,
                                     feature_group_count=mid, precision=hp)
    r = _bn_ref(r + params["bdw"][None, :, None, None], *params["bndw"])
    r = conv1x1(r, params["w2"], params["b2"])
    r = jnp.maximum(_bn_ref(r, *params["bn2"]), 0.0)

    # shortcut branch
    if downsample:
        n, c, hh, ww = p.shape
        sp = p.reshape(n, c, hh // 2, 2, ww // 2, 2).mean(axis=(3, 5))
        sp = _bn_ref(sp, *params["bnsc"])
        sc = conv1x1(sp, params["wsc"], params["bsc"])
    else:
        sc = p

    x1 = jnp.concatenate([sc, r], axis=1)
    if stride == 1 and out_channels == in_channels:
        x1 = x + x1
    n, c, hh, ww = x1.shape
    x1 = x1.reshape(n, 2, c // 2, hh, ww).transpose(0, 2, 1, 3, 4)
    return x1.reshape(n, c, hh, ww)


# ---------------------------------- main ------------------------------------ #

if __name__ == "__main__":
    key = jax.random.PRNGKey(0)
    k1, k2, k3, k4 = jax.random.split(key, 4)

    # --- case 1: identity branch (stride=1, in == out), exercises halo tiles.
    N, C, H, W = 2, 16, 16, 16
    x = jax.random.normal(k1, (N, C, H, W), jnp.float32)
    params = init_params(k2, C, C, 1)
    fwd = jax.jit(functools.partial(
        shuffle_unit, in_channels=C, out_channels=C, stride=1, row_tile=8))
    ref = jax.jit(functools.partial(
        shuffle_unit_reference, in_channels=C, out_channels=C, stride=1))
    y = fwd(x, params)
    y_ref = ref(x, params)
    jax.block_until_ready((y, y_ref))
    assert y.shape == (N, C, H, W), y.shape
    err = float(jnp.max(jnp.abs(y - y_ref)))
    assert err < 5e-2, f"stride-1 mismatch vs reference: max abs err = {err}"

    # --- case 2: downsample branch (stride=2, 16 -> 32 channels).
    C_OUT = 32
    x2 = jax.random.normal(k3, (N, C, H, W), jnp.float32)
    params2 = init_params(k4, C, C_OUT, 2)
    fwd2 = jax.jit(functools.partial(
        shuffle_unit, in_channels=C, out_channels=C_OUT, stride=2, row_tile=8))
    ref2 = jax.jit(functools.partial(
        shuffle_unit_reference, in_channels=C, out_channels=C_OUT, stride=2))
    y2 = fwd2(x2, params2)
    y2_ref = ref2(x2, params2)
    jax.block_until_ready((y2, y2_ref))
    assert y2.shape == (N, C_OUT, H // 2, W // 2), y2.shape
    err2 = float(jnp.max(jnp.abs(y2 - y2_ref)))
    assert err2 < 5e-2, f"stride-2 mismatch vs reference: max abs err = {err2}"

    print("KERNEL_OK")
</pallas_src>

<mosaic_0001>
module attributes {stable_mosaic.version = 11 : i64} {
  func.func @_shuffle_unit_kernel(%arg0: i32, %arg1: i32, %arg2: memref<1x16x16x16xf32, #tpu.memory_space<vmem>>, %arg3: memref<16x8xbf16, #tpu.memory_space<vmem>>, %arg4: memref<1x8xf32, #tpu.memory_space<vmem>>, %arg5: memref<1x8xf32, #tpu.memory_space<vmem>>, %arg6: memref<9x8xf32, #tpu.memory_space<vmem>>, %arg7: memref<1x8xf32, #tpu.memory_space<vmem>>, %arg8: memref<1x8xf32, #tpu.memory_space<vmem>>, %arg9: memref<8x8xbf16, #tpu.memory_space<vmem>>, %arg10: memref<1x8xf32, #tpu.memory_space<vmem>>, %arg11: memref<1x8xf32, #tpu.memory_space<vmem>>, %arg12: memref<1x8x16x16xf32, #tpu.memory_space<vmem>>, %arg13: memref<10x18x8xf32, #tpu.memory_space<vmem>>) attributes {dimension_semantics = [#tpu.dimension_semantics<parallel>, #tpu.dimension_semantics<parallel>], iteration_bounds = array<i64: 2, 2>, scalar_prefetch = 0 : i64, scratch_operands = 1 : i64, tpu.core_type = #tpu.core_type<tc>, window_params = [{transform_indices = @transform_0, window_bounds = array<i64: 1, 16, 16, 16>}, {pipeline_mode = #tpu.pipeline_mode<synchronous>, transform_indices = @transform_1, window_bounds = array<i64: 16, 8>}, {pipeline_mode = #tpu.pipeline_mode<synchronous>, transform_indices = @transform_2, window_bounds = array<i64: 1, 8>}, {pipeline_mode = #tpu.pipeline_mode<synchronous>, transform_indices = @transform_3, window_bounds = array<i64: 1, 8>}, {pipeline_mode = #tpu.pipeline_mode<synchronous>, transform_indices = @transform_4, window_bounds = array<i64: 9, 8>}, {pipeline_mode = #tpu.pipeline_mode<synchronous>, transform_indices = @transform_5, window_bounds = array<i64: 1, 8>}, {pipeline_mode = #tpu.pipeline_mode<synchronous>, transform_indices = @transform_6, window_bounds = array<i64: 1, 8>}, {pipeline_mode = #tpu.pipeline_mode<synchronous>, transform_indices = @transform_7, window_bounds = array<i64: 8, 8>}, {pipeline_mode = #tpu.pipeline_mode<synchronous>, transform_indices = @transform_8, window_bounds = array<i64: 1, 8>}, {pipeline_mode = #tpu.pipeline_mode<synchronous>, transform_indices = @transform_9, window_bounds = array<i64: 1, 8>}, {transform_indices = @transform_10, window_bounds = array<i64: 1, 8, 16, 16>}]} {
    %c8_i32 = arith.constant 8 : i32
    %0 = arith.muli %arg1, %c8_i32 : i32
    %c0 = arith.constant 0 : index
    %c0_0 = arith.constant 0 : index
    %1 = vector.load %arg3[%c0, %c0_0] : memref<16x8xbf16, #tpu.memory_space<vmem>>, vector<16x8xbf16>
    %c0_1 = arith.constant 0 : index
    %c0_2 = arith.constant 0 : index
    %2 = vector.load %arg4[%c0_1, %c0_2] : memref<1x8xf32, #tpu.memory_space<vmem>>, vector<1x8xf32>
    %c0_3 = arith.constant 0 : index
    %c0_4 = arith.constant 0 : index
    %3 = vector.load %arg5[%c0_3, %c0_4] : memref<1x8xf32, #tpu.memory_space<vmem>>, vector<1x8xf32>
    %cst = arith.constant 0.000000e+00 : f32
    %4 = vector.broadcast %cst : f32 to vector<10x18x8xf32>
    %c0_5 = arith.constant 0 : index
    %c0_6 = arith.constant 0 : index
    %c0_7 = arith.constant 0 : index
    %5 = vector.load %arg13[%c0_5, %c0_6, %c0_7] : memref<10x18x8xf32, #tpu.memory_space<vmem>>, vector<10x18x8xf32>
    tpu.vector_store %arg13[%c0_5, %c0_6, %c0_7], %4 {strides = array<i32>} : memref<10x18x8xf32, #tpu.memory_space<vmem>>, vector<10x18x8xf32>,
    %c0_8 = arith.constant 0 : index
    %6 = arith.index_cast %0 : i32 to index
    %c0_9 = arith.constant 0 : index
    %c0_10 = arith.constant 0 : index
    %7 = vector.load %arg2[%c0_8, %6, %c0_9, %c0_10] : memref<1x16x16x16xf32, #tpu.memory_space<vmem>>, vector<1x8x16x16xf32>
    %8 = vector.shape_cast %7 : vector<1x8x16x16xf32> to vector<8x16x16xf32>
    %9 = vector.shape_cast %8 : vector<8x16x16xf32> to vector<128x16xf32>
    %10 = arith.truncf %9 : vector<128x16xf32> to vector<128x16xbf16>
    %cst_11 = arith.constant dense<0.000000e+00> : vector<128x8xf32>
    %11 = tpu.matmul %10, %1, %cst_11 {dimension_numbers = #tpu.dot_dimension_numbers<[1], [0], [0], [1], [0, 0, 1, 1], [], []>} : vector<128x16xbf16>, vector<16x8xbf16>, vector<128x8xf32> -> vector<128x8xf32>
    %12 = vector.broadcast %2 : vector<1x8xf32> to vector<128x8xf32>
    %13 = arith.mulf %11, %12 : vector<128x8xf32>
    %14 = vector.broadcast %3 : vector<1x8xf32> to vector<128x8xf32>
    %15 = arith.addf %13, %14 : vector<128x8xf32>
    %cst_12 = arith.constant 0.000000e+00 : f32
    %16 = vector.broadcast %cst_12 : f32 to vector<128x8xf32>
    %17 = arith.maximumf %15, %16 : vector<128x8xf32>
    %18 = vector.shape_cast %17 : vector<128x8xf32> to vector<8x16x8xf32>
    %c1 = arith.constant 1 : index
    %c1_13 = arith.constant 1 : index
    %c0_14 = arith.constant 0 : index
    %19 = vector.load %arg13[%c1, %c1_13, %c0_14] : memref<10x18x8xf32, #tpu.memory_space<vmem>>, vector<8x16x8xf32>
    tpu.vector_store %arg13[%c1, %c1_13, %c0_14], %18 {strides = array<i32>} : memref<10x18x8xf32, #tpu.memory_space<vmem>>, vector<8x16x8xf32>,
    %c0_i32 = arith.constant 0 : i32
    %20 = arith.cmpi sgt, %arg1, %c0_i32 : i32
    %21 = arith.extui %20 : i1 to i32
    %c0_i32_15 = arith.constant 0 : i32
    %22 = arith.cmpi ne, %21, %c0_i32_15 : i32
    scf.if %22 {
      %c1_i32_84 = arith.constant 1 : i32
      %123 = arith.subi %0, %c1_i32_84 : i32
      %c0_85 = arith.constant 0 : index
      %124 = arith.index_cast %123 : i32 to index
      %c0_86 = arith.constant 0 : index
      %c0_87 = arith.constant 0 : index
      %125 = vector.load %arg2[%c0_85, %124, %c0_86, %c0_87] : memref<1x16x16x16xf32, #tpu.memory_space<vmem>>, vector<1x1x16x16xf32>
      %126 = vector.shape_cast %125 : vector<1x1x16x16xf32> to vector<1x16x16xf32>
      %127 = vector.shape_cast %126 : vector<1x16x16xf32> to vector<16x16xf32>
      %128 = arith.truncf %127 : vector<16x16xf32> to vector<16x16xbf16>
      %cst_88 = arith.constant dense<0.000000e+00> : vector<16x8xf32>
      %129 = tpu.matmul %128, %1, %cst_88 {dimension_numbers = #tpu.dot_dimension_numbers<[1], [0], [0], [1], [0, 0, 1, 1], [], []>} : vector<16x16xbf16>, vector<16x8xbf16>, vector<16x8xf32> -> vector<16x8xf32>
      %130 = vector.broadcast %2 : vector<1x8xf32> to vector<16x8xf32>
      %131 = arith.mulf %129, %130 : vector<16x8xf32>
      %132 = vector.broadcast %3 : vector<1x8xf32> to vector<16x8xf32>
      %133 = arith.addf %131, %132 : vector<16x8xf32>
      %cst_89 = arith.constant 0.000000e+00 : f32
      %134 = vector.broadcast %cst_89 : f32 to vector<16x8xf32>
      %135 = arith.maximumf %133, %134 : vector<16x8xf32>
      %136 = vector.shape_cast %135 : vector<16x8xf32> to vector<1x16x8xf32>
      %c0_90 = arith.constant 0 : index
      %c1_91 = arith.constant 1 : index
      %c0_92 = arith.constant 0 : index
      %137 = vector.load %arg13[%c0_90, %c1_91, %c0_92] : memref<10x18x8xf32, #tpu.memory_space<vmem>>, vector<1x16x8xf32>
      tpu.vector_store %arg13[%c0_90, %c1_91, %c0_92], %136 {strides = array<i32>} : memref<10x18x8xf32, #tpu.memory_space<vmem>>, vector<1x16x8xf32>,
    } else {
    }
    %c1_i32 = arith.constant 1 : i32
    %23 = arith.cmpi slt, %arg1, %c1_i32 : i32
    %24 = arith.extui %23 : i1 to i32
    %c0_i32_16 = arith.constant 0 : i32
    %25 = arith.cmpi ne, %24, %c0_i32_16 : i32
    scf.if %25 {
      %c8_i32_84 = arith.constant 8 : i32
      %123 = arith.addi %0, %c8_i32_84 : i32
      %c0_85 = arith.constant 0 : index
      %124 = arith.index_cast %123 : i32 to index
      %c0_86 = arith.constant 0 : index
      %c0_87 = arith.constant 0 : index
      %125 = vector.load %arg2[%c0_85, %124, %c0_86, %c0_87] : memref<1x16x16x16xf32, #tpu.memory_space<vmem>>, vector<1x1x16x16xf32>
      %126 = vector.shape_cast %125 : vector<1x1x16x16xf32> to vector<1x16x16xf32>
      %127 = vector.shape_cast %126 : vector<1x16x16xf32> to vector<16x16xf32>
      %128 = arith.truncf %127 : vector<16x16xf32> to vector<16x16xbf16>
      %cst_88 = arith.constant dense<0.000000e+00> : vector<16x8xf32>
      %129 = tpu.matmul %128, %1, %cst_88 {dimension_numbers = #tpu.dot_dimension_numbers<[1], [0], [0], [1], [0, 0, 1, 1], [], []>} : vector<16x16xbf16>, vector<16x8xbf16>, vector<16x8xf32> -> vector<16x8xf32>
      %130 = vector.broadcast %2 : vector<1x8xf32> to vector<16x8xf32>
      %131 = arith.mulf %129, %130 : vector<16x8xf32>
      %132 = vector.broadcast %3 : vector<1x8xf32> to vector<16x8xf32>
      %133 = arith.addf %131, %132 : vector<16x8xf32>
      %cst_89 = arith.constant 0.000000e+00 : f32
      %134 = vector.broadcast %cst_89 : f32 to vector<16x8xf32>
      %135 = arith.maximumf %133, %134 : vector<16x8xf32>
      %136 = vector.shape_cast %135 : vector<16x8xf32> to vector<1x16x8xf32>
      %c9 = arith.constant 9 : index
      %c1_90 = arith.constant 1 : index
      %c0_91 = arith.constant 0 : index
      %137 = vector.load %arg13[%c9, %c1_90, %c0_91] : memref<10x18x8xf32, #tpu.memory_space<vmem>>, vector<1x16x8xf32>
      tpu.vector_store %arg13[%c9, %c1_90, %c0_91], %136 {strides = array<i32>} : memref<10x18x8xf32, #tpu.memory_space<vmem>>, vector<1x16x8xf32>,
    } else {
    }
    %cst_17 = arith.constant 0.000000e+00 : f32
    %26 = vector.broadcast %cst_17 : f32 to vector<8x16x8xf32>
    %c0_18 = arith.constant 0 : index
    %c0_19 = arith.constant 0 : index
    %c0_20 = arith.constant 0 : index
    %27 = vector.load %arg13[%c0_18, %c0_19, %c0_20] : memref<10x18x8xf32, #tpu.memory_space<vmem>>, vector<8x16x8xf32>
    %c0_21 = arith.constant 0 : index
    %c0_22 = arith.constant 0 : index
    %28 = vector.load %arg6[%c0_21, %c0_22] : memref<9x8xf32, #tpu.memory_space<vmem>>, vector<1x8xf32>
    %29 = vector.shape_cast %28 : vector<1x8xf32> to vector<8xf32>
    %30 = vector.shape_cast %29 : vector<8xf32> to vector<1x1x8xf32>
    %31 = vector.broadcast %30 : vector<1x1x8xf32> to vector<8x16x8xf32>
    %32 = arith.mulf %27, %31 : vector<8x16x8xf32>
    %33 = arith.addf %26, %32 : vector<8x16x8xf32>
    %c0_23 = arith.constant 0 : index
    %c1_24 = arith.constant 1 : index
    %c0_25 = arith.constant 0 : index
    %34 = vector.load %arg13[%c0_23, %c1_24, %c0_25] : memref<10x18x8xf32, #tpu.memory_space<vmem>>, vector<8x16x8xf32>
    %c1_26 = arith.constant 1 : index
    %c0_27 = arith.constant 0 : index
    %35 = vector.load %arg6[%c1_26, %c0_27] : memref<9x8xf32, #tpu.memory_space<vmem>>, vector<1x8xf32>
    %36 = vector.shape_cast %35 : vector<1x8xf32> to vector<8xf32>
    %37 = vector.shape_cast %36 : vector<8xf32> to vector<1x1x8xf32>
    %38 = vector.broadcast %37 : vector<1x1x8xf32> to vector<8x16x8xf32>
    %39 = arith.mulf %34, %38 : vector<8x16x8xf32>
    %40 = arith.addf %33, %39 : vector<8x16x8xf32>
    %c0_28 = arith.constant 0 : index
    %c2 = arith.constant 2 : index
    %c0_29 = arith.constant 0 : index
    %41 = vector.load %arg13[%c0_28, %c2, %c0_29] : memref<10x18x8xf32, #tpu.memory_space<vmem>>, vector<8x16x8xf32>
    %c2_30 = arith.constant 2 : index
    %c0_31 = arith.constant 0 : index
    %42 = vector.load %arg6[%c2_30, %c0_31] : memref<9x8xf32, #tpu.memory_space<vmem>>, vector<1x8xf32>
    %43 = vector.shape_cast %42 : vector<1x8xf32> to vector<8xf32>
    %44 = vector.shape_cast %43 : vector<8xf32> to vector<1x1x8xf32>
    %45 = vector.broadcast %44 : vector<1x1x8xf32> to vector<8x16x8xf32>
    %46 = arith.mulf %41, %45 : vector<8x16x8xf32>
    %47 = arith.addf %40, %46 : vector<8x16x8xf32>
    %c1_32 = arith.constant 1 : index
    %c0_33 = arith.constant 0 : index
    %c0_34 = arith.constant 0 : index
    %48 = vector.load %arg13[%c1_32, %c0_33, %c0_34] : memref<10x18x8xf32, #tpu.memory_space<vmem>>, vector<8x16x8xf32>
    %c3 = arith.constant 3 : index
    %c0_35 = arith.constant 0 : index
    %49 = vector.load %arg6[%c3, %c0_35] : memref<9x8xf32, #tpu.memory_space<vmem>>, vector<1x8xf32>
    %50 = vector.shape_cast %49 : vector<1x8xf32> to vector<8xf32>
    %51 = vector.shape_cast %50 : vector<8xf32> to vector<1x1x8xf32>
    %52 = vector.broadcast %51 : vector<1x1x8xf32> to vector<8x16x8xf32>
    %53 = arith.mulf %48, %52 : vector<8x16x8xf32>
    %54 = arith.addf %47, %53 : vector<8x16x8xf32>
    %c1_36 = arith.constant 1 : index
    %c1_37 = arith.constant 1 : index
    %c0_38 = arith.constant 0 : index
    %55 = vector.load %arg13[%c1_36, %c1_37, %c0_38] : memref<10x18x8xf32, #tpu.memory_space<vmem>>, vector<8x16x8xf32>
    %c4 = arith.constant 4 : index
    %c0_39 = arith.constant 0 : index
    %56 = vector.load %arg6[%c4, %c0_39] : memref<9x8xf32, #tpu.memory_space<vmem>>, vector<1x8xf32>
    %57 = vector.shape_cast %56 : vector<1x8xf32> to vector<8xf32>
    %58 = vector.shape_cast %57 : vector<8xf32> to vector<1x1x8xf32>
    %59 = vector.broadcast %58 : vector<1x1x8xf32> to vector<8x16x8xf32>
    %60 = arith.mulf %55, %59 : vector<8x16x8xf32>
    %61 = arith.addf %54, %60 : vector<8x16x8xf32>
    %c1_40 = arith.constant 1 : index
    %c2_41 = arith.constant 2 : index
    %c0_42 = arith.constant 0 : index
    %62 = vector.load %arg13[%c1_40, %c2_41, %c0_42] : memref<10x18x8xf32, #tpu.memory_space<vmem>>, vector<8x16x8xf32>
    %c5 = arith.constant 5 : index
    %c0_43 = arith.constant 0 : index
    %63 = vector.load %arg6[%c5, %c0_43] : memref<9x8xf32, #tpu.memory_space<vmem>>, vector<1x8xf32>
    %64 = vector.shape_cast %63 : vector<1x8xf32> to vector<8xf32>
    %65 = vector.shape_cast %64 : vector<8xf32> to vector<1x1x8xf32>
    %66 = vector.broadcast %65 : vector<1x1x8xf32> to vector<8x16x8xf32>
    %67 = arith.mulf %62, %66 : vector<8x16x8xf32>
    %68 = arith.addf %61, %67 : vector<8x16x8xf32>
    %c2_44 = arith.constant 2 : index
    %c0_45 = arith.constant 0 : index
    %c0_46 = arith.constant 0 : index
    %69 = vector.load %arg13[%c2_44, %c0_45, %c0_46] : memref<10x18x8xf32, #tpu.memory_space<vmem>>, vector<8x16x8xf32>
    %c6 = arith.constant 6 : index
    %c0_47 = arith.constant 0 : index
    %70 = vector.load %arg6[%c6, %c0_47] : memref<9x8xf32, #tpu.memory_space<vmem>>, vector<1x8xf32>
    %71 = vector.shape_cast %70 : vector<1x8xf32> to vector<8xf32>
    %72 = vector.shape_cast %71 : vector<8xf32> to vector<1x1x8xf32>
    %73 = vector.broadcast %72 : vector<1x1x8xf32> to vector<8x16x8xf32>
    %74 = arith.mulf %69, %73 : vector<8x16x8xf32>
    %75 = arith.addf %68, %74 : vector<8x16x8xf32>
    %c2_48 = arith.constant 2 : index
    %c1_49 = arith.constant 1 : index
    %c0_50 = arith.constant 0 : index
    %76 = vector.load %arg13[%c2_48, %c1_49, %c0_50] : memref<10x18x8xf32, #tpu.memory_space<vmem>>, vector<8x16x8xf32>
    %c7 = arith.constant 7 : index
    %c0_51 = arith.constant 0 : index
    %77 = vector.load %arg6[%c7, %c0_51] : memref<9x8xf32, #tpu.memory_space<vmem>>, vector<1x8xf32>
    %78 = vector.shape_cast %77 : vector<1x8xf32> to vector<8xf32>
    %79 = vector.shape_cast %78 : vector<8xf32> to vector<1x1x8xf32>
    %80 = vector.broadcast %79 : vector<1x1x8xf32> to vector<8x16x8xf32>
    %81 = arith.mulf %76, %80 : vector<8x16x8xf32>
    %82 = arith.addf %75, %81 : vector<8x16x8xf32>
    %c2_52 = arith.constant 2 : index
    %c2_53 = arith.constant 2 : index
    %c0_54 = arith.constant 0 : index
    %83 = vector.load %arg13[%c2_52, %c2_53, %c0_54] : memref<10x18x8xf32, #tpu.memory_space<vmem>>, vector<8x16x8xf32>
    %c8 = arith.constant 8 : index
    %c0_55 = arith.constant 0 : index
    %84 = vector.load %arg6[%c8, %c0_55] : memref<9x8xf32, #tpu.memory_space<vmem>>, vector<1x8xf32>
    %85 = vector.shape_cast %84 : vector<1x8xf32> to vector<8xf32>
    %86 = vector.shape_cast %85 : vector<8xf32> to vector<1x1x8xf32>
    %87 = vector.broadcast %86 : vector<1x1x8xf32> to vector<8x16x8xf32>
    %88 = arith.mulf %83, %87 : vector<8x16x8xf32>
    %89 = arith.addf %82, %88 : vector<8x16x8xf32>
    %c0_56 = arith.constant 0 : index
    %c0_57 = arith.constant 0 : index
    %90 = vector.load %arg7[%c0_56, %c0_57] : memref<1x8xf32, #tpu.memory_space<vmem>>, vector<1x8xf32>
    %91 = vector.shape_cast %90 : vector<1x8xf32> to vector<1x1x8xf32>
    %92 = vector.broadcast %91 : vector<1x1x8xf32> to vector<8x16x8xf32>
    %93 = arith.mulf %89, %92 : vector<8x16x8xf32>
    %c0_58 = arith.constant 0 : index
    %c0_59 = arith.constant 0 : index
    %94 = vector.load %arg8[%c0_58, %c0_59] : memref<1x8xf32, #tpu.memory_space<vmem>>, vector<1x8xf32>
    %95 = vector.shape_cast %94 : vector<1x8xf32> to vector<1x1x8xf32>
    %96 = vector.broadcast %95 : vector<1x1x8xf32> to vector<8x16x8xf32>
    %97 = arith.addf %93, %96 : vector<8x16x8xf32>
    %98 = vector.shape_cast %97 : vector<8x16x8xf32> to vector<128x8xf32>
    %99 = arith.truncf %98 : vector<128x8xf32> to vector<128x8xbf16>
    %c0_60 = arith.constant 0 : index
    %c0_61 = arith.constant 0 : index
    %100 = vector.load %arg9[%c0_60, %c0_61] : memref<8x8xbf16, #tpu.memory_space<vmem>>, vector<8x8xbf16>
    %cst_62 = arith.constant dense<0.000000e+00> : vector<128x8xf32>
    %101 = tpu.matmul %99, %100, %cst_62 {dimension_numbers = #tpu.dot_dimension_numbers<[1], [0], [0], [1], [0, 0, 1, 1], [], []>} : vector<128x8xbf16>, vector<8x8xbf16>, vector<128x8xf32> -> vector<128x8xf32>
    %c0_63 = arith.constant 0 : index
    %c0_64 = arith.constant 0 : index
    %102 = vector.load %arg10[%c0_63, %c0_64] : memref<1x8xf32, #tpu.memory_space<vmem>>, vector<1x8xf32>
    %103 = vector.broadcast %102 : vector<1x8xf32> to vector<128x8xf32>
    %104 = arith.mulf %101, %103 : vector<128x8xf32>
    %c0_65 = arith.constant 0 : index
    %c0_66 = arith.constant 0 : index
    %105 = vector.load %arg11[%c0_65, %c0_66] : memref<1x8xf32, #tpu.memory_space<vmem>>, vector<1x8xf32>
    %106 = vector.broadcast %105 : vector<1x8xf32> to vector<128x8xf32>
    %107 = arith.addf %104, %106 : vector<128x8xf32>
    %cst_67 = arith.constant 0.000000e+00 : f32
    %108 = vector.broadcast %cst_67 : f32 to vector<128x8xf32>
    %109 = arith.maximumf %107, %108 : vector<128x8xf32>
    %110 = vector.shape_cast %109 : vector<128x8xf32> to vector<8x16x8xf32>
    %c0_68 = arith.constant 0 : index
    %c0_69 = arith.constant 0 : index
    %c0_70 = arith.constant 0 : index
    %c0_71 = arith.constant 0 : index
    %111 = vector.load %arg12[%c0_68, %c0_69, %c0_70, %c0_71] : memref<1x8x16x16xf32, #tpu.memory_space<vmem>>, vector<1x8x16x8xf32>
    %112 = vector.shape_cast %111 : vector<1x8x16x8xf32> to vector<8x16x8xf32>
    %113 = vector.shape_cast %18 : vector<8x16x8xf32> to vector<1x8x16x8xf32>
    tpu.vector_store %arg12[%c0_68, %c0_69, %c0_70, %c0_71], %113 {strides = array<i32>} : memref<1x8x16x16xf32, #tpu.memory_space<vmem>>, vector<1x8x16x8xf32>,
    %c0_72 = arith.constant 0 : index
    %c0_73 = arith.constant 0 : index
    %c0_74 = arith.constant 0 : index
    %c8_75 = arith.constant 8 : index
    %114 = vector.load %arg12[%c0_72, %c0_73, %c0_74, %c8_75] : memref<1x8x16x16xf32, #tpu.memory_space<vmem>>, vector<1x8x16x8xf32>
    %115 = vector.shape_cast %114 : vector<1x8x16x8xf32> to vector<8x16x8xf32>
    %116 = vector.shape_cast %110 : vector<8x16x8xf32> to vector<1x8x16x8xf32>
    tpu.vector_store %arg12[%c0_72, %c0_73, %c0_74, %c8_75], %116 {strides = array<i32>} : memref<1x8x16x16xf32, #tpu.memory_space<vmem>>, vector<1x8x16x8xf32>,
    %c0_76 = arith.constant 0 : index
    %c0_77 = arith.constant 0 : index
    %c0_78 = arith.constant 0 : index
    %c0_79 = arith.constant 0 : index
    %117 = vector.load %arg12[%c0_76, %c0_77, %c0_78, %c0_79] : memref<1x8x16x16xf32, #tpu.memory_space<vmem>>, vector<1x8x16x16xf32>
    %118 = vector.shape_cast %117 : vector<1x8x16x16xf32> to vector<8x16x16xf32>
    %119 = arith.addf %118, %8 : vector<8x16x16xf32>
    %c0_80 = arith.constant 0 : index
    %c0_81 = arith.constant 0 : index
    %c0_82 = arith.constant 0 : index
    %c0_83 = arith.constant 0 : index
    %120 = vector.load %arg12[%c0_80, %c0_81, %c0_82, %c0_83] : memref<1x8x16x16xf32, #tpu.memory_space<vmem>>, vector<1x8x16x16xf32>
    %121 = vector.shape_cast %120 : vector<1x8x16x16xf32> to vector<8x16x16xf32>
    %122 = vector.shape_cast %119 : vector<8x16x16xf32> to vector<1x8x16x16xf32>
    tpu.vector_store %arg12[%c0_80, %c0_81, %c0_82, %c0_83], %122 {strides = array<i32>} : memref<1x8x16x16xf32, #tpu.memory_space<vmem>>, vector<1x8x16x16xf32>,
    return
  }
  func.func @transform_0(%arg0: i32, %arg1: i32) -> (i32, i32, i32, i32) {
    %c0_i32 = arith.constant 0 : i32
    %c0_i32_0 = arith.constant 0 : i32
    %c0_i32_1 = arith.constant 0 : i32
    %c0_i32_2 = arith.constant 0 : i32
    return %arg0, %c0_i32, %c0_i32_0, %c0_i32_1 : i32, i32, i32, i32
  }
  func.func @transform_1(%arg0: i32, %arg1: i32) -> (i32, i32) {
    %c0_i32 = arith.constant 0 : i32
    %c0_i32_0 = arith.constant 0 : i32
    %c0_i32_1 = arith.constant 0 : i32
    return %c0_i32, %c0_i32_0 : i32, i32
  }
  func.func @transform_2(%arg0: i32, %arg1: i32) -> (i32, i32) {
    %c0_i32 = arith.constant 0 : i32
    %c0_i32_0 = arith.constant 0 : i32
    %c0_i32_1 = arith.constant 0 : i32
    return %c0_i32, %c0_i32_0 : i32, i32
  }
  func.func @transform_3(%arg0: i32, %arg1: i32) -> (i32, i32) {
    %c0_i32 = arith.constant 0 : i32
    %c0_i32_0 = arith.constant 0 : i32
    %c0_i32_1 = arith.constant 0 : i32
    return %c0_i32, %c0_i32_0 : i32, i32
  }
  func.func @transform_4(%arg0: i32, %arg1: i32) -> (i32, i32) {
    %c0_i32 = arith.constant 0 : i32
    %c0_i32_0 = arith.constant 0 : i32
    %c0_i32_1 = arith.constant 0 : i32
    return %c0_i32, %c0_i32_0 : i32, i32
  }
  func.func @transform_5(%arg0: i32, %arg1: i32) -> (i32, i32) {
    %c0_i32 = arith.constant 0 : i32
    %c0_i32_0 = arith.constant 0 : i32
    %c0_i32_1 = arith.constant 0 : i32
    return %c0_i32, %c0_i32_0 : i32, i32
  }
  func.func @transform_6(%arg0: i32, %arg1: i32) -> (i32, i32) {
    %c0_i32 = arith.constant 0 : i32
    %c0_i32_0 = arith.constant 0 : i32
    %c0_i32_1 = arith.constant 0 : i32
    return %c0_i32, %c0_i32_0 : i32, i32
  }
  func.func @transform_7(%arg0: i32, %arg1: i32) -> (i32, i32) {
    %c0_i32 = arith.constant 0 : i32
    %c0_i32_0 = arith.constant 0 : i32
    %c0_i32_1 = arith.constant 0 : i32
    return %c0_i32, %c0_i32_0 : i32, i32
  }
  func.func @transform_8(%arg0: i32, %arg1: i32) -> (i32, i32) {
    %c0_i32 = arith.constant 0 : i32
    %c0_i32_0 = arith.constant 0 : i32
    %c0_i32_1 = arith.constant 0 : i32
    return %c0_i32, %c0_i32_0 : i32, i32
  }
  func.func @transform_9(%arg0: i32, %arg1: i32) -> (i32, i32) {
    %c0_i32 = arith.constant 0 : i32
    %c0_i32_0 = arith.constant 0 : i32
    %c0_i32_1 = arith.constant 0 : i32
    return %c0_i32, %c0_i32_0 : i32, i32
  }
  func.func @transform_10(%arg0: i32, %arg1: i32) -> (i32, i32, i32, i32) {
    %c0_i32 = arith.constant 0 : i32
    %c0_i32_0 = arith.constant 0 : i32
    %c0_i32_1 = arith.constant 0 : i32
    return %arg0, %arg1, %c0_i32, %c0_i32_0 : i32, i32, i32, i32
  }
}

</mosaic_0001>

<llo_original>
// kernel: shuffle_unit.1
$region0: #{shuffle_unit.1}
  #allocation0 [shape = 'u32[]', space=smem, size = 0x4, offset = 0x4, fixed_abs, tag = 'smem constant byte address 0x4 - core index']
  #allocation1 [shape = 'u32[72,128]{1,0:T(1,128)}', space=vmem, size = 0x9000, scoped, tag = 'internal scratch']
  #allocation2 [shape = 'f32[10,18,8]{2,1,0:T(8,128)}', space=vmem, size = 0x1e000, scoped, tag = 'scratch operand']
  %s0 = inlined_call_operand.vmem [shape: f32[2,16,16,16], index: 0, kind: input, shape index: {}]
  %s1 = inlined_call_operand.vmem [shape: bf16[16,8], index: 1, kind: input, shape index: {}]
  %s2 = inlined_call_operand.vmem [shape: f32[1,8], index: 2, kind: input, shape index: {}]
  %s3 = inlined_call_operand.vmem [shape: f32[1,8], index: 3, kind: input, shape index: {}]
  %s4 = inlined_call_operand.vmem [shape: f32[9,8], index: 4, kind: input, shape index: {}]
  %s5 = inlined_call_operand.vmem [shape: f32[1,8], index: 5, kind: input, shape index: {}]
  %s6 = inlined_call_operand.vmem [shape: f32[1,8], index: 6, kind: input, shape index: {}]
  %s7 = inlined_call_operand.vmem [shape: bf16[8,8], index: 7, kind: input, shape index: {}]
  %s8 = inlined_call_operand.vmem [shape: f32[1,8], index: 8, kind: input, shape index: {}]
  %s9 = inlined_call_operand.vmem [shape: f32[1,8], index: 9, kind: input, shape index: {}]
  %s10 = inlined_call_operand.vmem [shape: f32[2,16,16,16], index: 10, kind: output, shape index: {}]
  %s11 = sld [smem:[#allocation0]]
  $region81: #{shuffle_unit.1} parent=0
    _
  %s13 = ssub.s32 1, %s11
  %s14 = scalar_select 0, %s13, %s11
  loop: start=0, step=1, limit=6
  $region2: #{shuffle_unit.1} parent=0 // loop_pre_header
    _
  $region3: #{shuffle_unit.1} parent=0 // loop_header
    %s16 = sphi 0, %s20
    %p17 = scmp.ge.s32.totalorder %s16, 6
    %s23 = sphi 0, %s35
    %s24 = sphi 0, %s31
    %s25 = sphi 0, %s23
    %s26 = sphi 0, %s24
    %s27 = sphi 0, %s25
    %s28 = sphi 0, %s26
    %s38 = sphi 0, %s40
    %s41 = sphi 0, %s38
    %s42 = sphi 0, %s41
    %s58 = sphi 0, %s42
    %s62 = sphi 0, %s62
    %s64 = sphi 0, %s62
    %s65 = sphi 0, %s64
    %s79 = sphi 0, %s65
    %s83 = sphi 0, %s83
    %s85 = sphi 0, %s83
    %s86 = sphi 0, %s85
    %s100 = sphi 0, %s86
    %s104 = sphi 0, %s104
    %s106 = sphi 0, %s104
    %s107 = sphi 0, %s106
    %s121 = sphi 0, %s107
    %s125 = sphi 0, %s125
    %s127 = sphi 0, %s125
    %s128 = sphi 0, %s127
    %s142 = sphi 0, %s128
    %s146 = sphi 0, %s146
    %s148 = sphi 0, %s146
    %s149 = sphi 0, %s148
    %s163 = sphi 0, %s149
    %s167 = sphi 0, %s167
    %s169 = sphi 0, %s167
    %s170 = sphi 0, %s169
    %s184 = sphi 0, %s170
    %s188 = sphi 0, %s188
    %s190 = sphi 0, %s188
    %s191 = sphi 0, %s190
    %s205 = sphi 0, %s191
    %s209 = sphi 0, %s209
    %s211 = sphi 0, %s209
    %s212 = sphi 0, %s211
    %s226 = sphi 0, %s212
    %s230 = sphi 0, %s230
    %s232 = sphi 0, %s230
    %s233 = sphi 0, %s232
    %s247 = sphi 0, %s233
    %s255 = sphi 0, %s257
    %s258 = sphi 0, %s255
    %s259 = sphi 0, %s258
    %s275 = sphi 0, %s259
  $region4: #{shuffle_unit.1} parent=0 // loop_header_branch
    %19 = sbr.rel (%p17) target = $region8
  $region5: #{shuffle_unit.1} parent=0 // loop_body
    %s21 = ssub.s32 %s16, 1
    %s22 = ssub.s32 %s16, 2
    %s29 = sadd.s32 1, %s24
    %p30 = scmp.ge.s32.totalorder %s29, 2
    %s31 = scalar_select %p30, 0, %s29
    %s32 = sadd.s32 1, %s23
    %s33 = scalar_select %p30, %s32, %s23
    %p34 = scmp.ge.s32.totalorder %s33, 2
    %s35 = scalar_select %p34, 0, %s33
    %s36 = ssub.s32 %s23, %s35
    %p37 = scmp.eq.s32.totalorder %s36, 0
    %s39 = sadd.s32 %s38, 1
    %s40 = scalar_select %p37, %s38, %s39
    %p43 = pneg %p37
    %p44 = scmp.eq.s32.totalorder %s16, 3
    %p45 = por %p43, %p44
    %p46 = scmp.ne.s32.totalorder %s38, %s41
    %p47 = scmp.eq.s32.totalorder %s16, 0
    %p48 = por %p46, %p47
    %p49 = scmp.ne.s32.totalorder %s38, %s41
    %p50 = scmp.eq.s32.totalorder %s21, 3
    %p51 = por %p49, %p50
    %p52 = scmp.ne.s32.totalorder %s41, %s42
    %p53 = scmp.eq.s32.totalorder %s21, 0
    %p54 = por %p52, %p53
    %p55 = scmp.ne.s32.totalorder %s41, %s42
    %p56 = scmp.eq.s32.totalorder %s22, 3
    %p57 = por %p55, %p56
    %p59 = scmp.ne.s32.totalorder %s42, %s58
    %p60 = scmp.eq.s32.totalorder %s22, 0
    %p61 = por %p59, %p60
    %s63 = sadd.s32 %s62, 1
    %p66 = scmp.eq.s32.totalorder %s16, 3
    %p67 = scmp.ne.s32.totalorder %s62, %s64
    %p68 = scmp.eq.s32.totalorder %s16, 0
    %p69 = por %p67, %p68
    %p70 = scmp.ne.s32.totalorder %s62, %s64
    %p71 = scmp.eq.s32.totalorder %s21, 3
    %p72 = por %p70, %p71
    %p73 = scmp.ne.s32.totalorder %s64, %s65
    %p74 = scmp.eq.s32.totalorder %s21, 0
    %p75 = por %p73, %p74
    %p76 = scmp.ne.s32.totalorder %s64, %s65
    %p77 = scmp.eq.s32.totalorder %s22, 3
    %p78 = por %p76, %p77
    %p80 = scmp.ne.s32.totalorder %s65, %s79
    %p81 = scmp.eq.s32.totalorder %s22, 0
    %p82 = por %p80, %p81
    %s84 = sadd.s32 %s83, 1
    %p87 = scmp.eq.s32.totalorder %s16, 3
    %p88 = scmp.ne.s32.totalorder %s83, %s85
    %p89 = scmp.eq.s32.totalorder %s16, 0
    %p90 = por %p88, %p89
    %p91 = scmp.ne.s32.totalorder %s83, %s85
    %p92 = scmp.eq.s32.totalorder %s21, 3
    %p93 = por %p91, %p92
    %p94 = scmp.ne.s32.totalorder %s85, %s86
    %p95 = scmp.eq.s32.totalorder %s21, 0
    %p96 = por %p94, %p95
    %p97 = scmp.ne.s32.totalorder %s85, %s86
    %p98 = scmp.eq.s32.totalorder %s22, 3
    %p99 = por %p97, %p98
    %p101 = scmp.ne.s32.totalorder %s86, %s100
    %p102 = scmp.eq.s32.totalorder %s22, 0
    %p103 = por %p101, %p102
    %s105 = sadd.s32 %s104, 1
    %p108 = scmp.eq.s32.totalorder %s16, 3
    %p109 = scmp.ne.s32.totalorder %s104, %s106
    %p110 = scmp.eq.s32.totalorder %s16, 0
    %p111 = por %p109, %p110
    %p112 = scmp.ne.s32.totalorder %s104, %s106
    %p113 = scmp.eq.s32.totalorder %s21, 3
    %p114 = por %p112, %p113
    %p115 = scmp.ne.s32.totalorder %s106, %s107
    %p116 = scmp.eq.s32.totalorder %s21, 0
    %p117 = por %p115, %p116
    %p118 = scmp.ne.s32.totalorder %s106, %s107
    %p119 = scmp.eq.s32.totalorder %s22, 3
    %p120 = por %p118, %p119
    %p122 = scmp.ne.s32.totalorder %s107, %s121
    %p123 = scmp.eq.s32.totalorder %s22, 0
    %p124 = por %p122, %p123
    %s126 = sadd.s32 %s125, 1
    %p129 = scmp.eq.s32.totalorder %s16, 3
    %p130 = scmp.ne.s32.totalorder %s125, %s127
    %p131 = scmp.eq.s32.totalorder %s16, 0
    %p132 = por %p130, %p131
    %p133 = scmp.ne.s32.totalorder %s125, %s127
    %p134 = scmp.eq.s32.totalorder %s21, 3
    %p135 = por %p133, %p134
    %p136 = scmp.ne.s32.totalorder %s127, %s128
    %p137 = scmp.eq.s32.totalorder %s21, 0
    %p138 = por %p136, %p137
    %p139 = scmp.ne.s32.totalorder %s127, %s128
    %p140 = scmp.eq.s32.totalorder %s22, 3
    %p141 = por %p139, %p140
    %p143 = scmp.ne.s32.totalorder %s128, %s142
    %p144 = scmp.eq.s32.totalorder %s22, 0
    %p145 = por %p143, %p144
    %s147 = sadd.s32 %s146, 1
    %p150 = scmp.eq.s32.totalorder %s16, 3
    %p151 = scmp.ne.s32.totalorder %s146, %s148
    %p152 = scmp.eq.s32.totalorder %s16, 0
    %p153 = por %p151, %p152
    %p154 = scmp.ne.s32.totalorder %s146, %s148
    %p155 = scmp.eq.s32.totalorder %s21, 3
    %p156 = por %p154, %p155
    %p157 = scmp.ne.s32.totalorder %s148, %s149
    %p158 = scmp.eq.s32.totalorder %s21, 0
    %p159 = por %p157, %p158
    %p160 = scmp.ne.s32.totalorder %s148, %s149
    %p161 = scmp.eq.s32.totalorder %s22, 3
    %p162 = por %p160, %p161
    %p164 = scmp.ne.s32.totalorder %s149, %s163
    %p165 = scmp.eq.s32.totalorder %s22, 0
    %p166 = por %p164, %p165
    %s168 = sadd.s32 %s167, 1
    %p171 = scmp.eq.s32.totalorder %s16, 3
    %p172 = scmp.ne.s32.totalorder %s167, %s169
    %p173 = scmp.eq.s32.totalorder %s16, 0
    %p174 = por %p172, %p173
    %p175 = scmp.ne.s32.totalorder %s167, %s169
    %p176 = scmp.eq.s32.totalorder %s21, 3
    %p177 = por %p175, %p176
    %p178 = scmp.ne.s32.totalorder %s169, %s170
    %p179 = scmp.eq.s32.totalorder %s21, 0
    %p180 = por %p178, %p179
    %p181 = scmp.ne.s32.totalorder %s169, %s170
    %p182 = scmp.eq.s32.totalorder %s22, 3
    %p183 = por %p181, %p182
    %p185 = scmp.ne.s32.totalorder %s170, %s184
    %p186 = scmp.eq.s32.totalorder %s22, 0
    %p187 = por %p185, %p186
    %s189 = sadd.s32 %s188, 1
    %p192 = scmp.eq.s32.totalorder %s16, 3
    %p193 = scmp.ne.s32.totalorder %s188, %s190
    %p194 = scmp.eq.s32.totalorder %s16, 0
    %p195 = por %p193, %p194
    %p196 = scmp.ne.s32.totalorder %s188, %s190
    %p197 = scmp.eq.s32.totalorder %s21, 3
    %p198 = por %p196, %p197
    %p199 = scmp.ne.s32.totalorder %s190, %s191
    %p200 = scmp.eq.s32.totalorder %s21, 0
    %p201 = por %p199, %p200
    %p202 = scmp.ne.s32.totalorder %s190, %s191
    %p203 = scmp.eq.s32.totalorder %s22, 3
    %p204 = por %p202, %p203
    %p206 = scmp.ne.s32.totalorder %s191, %s205
    %p207 = scmp.eq.s32.totalorder %s22, 0
    %p208 = por %p206, %p207
    %s210 = sadd.s32 %s209, 1
    %p213 = scmp.eq.s32.totalorder %s16, 3
    %p214 = scmp.ne.s32.totalorder %s209, %s211
    %p215 = scmp.eq.s32.totalorder %s16, 0
    %p216 = por %p214, %p215
    %p217 = scmp.ne.s32.totalorder %s209, %s211
    %p218 = scmp.eq.s32.totalorder %s21, 3
    %p219 = por %p217, %p218
    %p220 = scmp.ne.s32.totalorder %s211, %s212
    %p221 = scmp.eq.s32.totalorder %s21, 0
    %p222 = por %p220, %p221
    %p223 = scmp.ne.s32.totalorder %s211, %s212
    %p224 = scmp.eq.s32.totalorder %s22, 3
    %p225 = por %p223, %p224
    %p227 = scmp.ne.s32.totalorder %s212, %s226
    %p228 = scmp.eq.s32.totalorder %s22, 0
    %p229 = por %p227, %p228
    %s231 = sadd.s32 %s230, 1
    %p234 = scmp.eq.s32.totalorder %s16, 3
    %p235 = scmp.ne.s32.totalorder %s230, %s232
    %p236 = scmp.eq.s32.totalorder %s16, 0
    %p237 = por %p235, %p236
    %p238 = scmp.ne.s32.totalorder %s230, %s232
    %p239 = scmp.eq.s32.totalorder %s21, 3
    %p240 = por %p238, %p239
    %p241 = scmp.ne.s32.totalorder %s232, %s233
    %p242 = scmp.eq.s32.totalorder %s21, 0
    %p243 = por %p241, %p242
    %p244 = scmp.ne.s32.totalorder %s232, %s233
    %p245 = scmp.eq.s32.totalorder %s22, 3
    %p246 = por %p244, %p245
    %p248 = scmp.ne.s32.totalorder %s233, %s247
    %p249 = scmp.eq.s32.totalorder %s22, 0
    %p250 = por %p248, %p249
    %s251 = ssub.s32 %s23, %s35
    %s252 = ssub.s32 %s24, %s31
    %s253 = sor.u32 %s251, %s252
    %p254 = scmp.eq.s32.totalorder %s253, 0
    %s256 = sadd.s32 %s255, 1
    %s257 = scalar_select %p254, %s255, %s256
    %p260 = pneg %p254
    %p261 = scmp.eq.s32.totalorder %s16, 3
    %p262 = por %p260, %p261
    %p263 = scmp.ne.s32.totalorder %s255, %s258
    %p264 = scmp.eq.s32.totalorder %s16, 0
    %p265 = por %p263, %p264
    %p266 = scmp.ne.s32.totalorder %s255, %s258
    %p267 = scmp.eq.s32.totalorder %s21, 3
    %p268 = por %p266, %p267
    %p269 = scmp.ne.s32.totalorder %s258, %s259
    %p270 = scmp.eq.s32.totalorder %s21, 0
    %p271 = por %p269, %p270
    %p272 = scmp.ne.s32.totalorder %s258, %s259
    %p273 = scmp.eq.s32.totalorder %s22, 3
    %p274 = por %p272, %p273
    %p276 = scmp.ne.s32.totalorder %s259, %s275
    %p277 = scmp.eq.s32.totalorder %s22, 0
    %p278 = por %p276, %p277
    %p279 = scmp.le.s32.totalorder 1, %s16
    %p280 = scmp.lt.s32.totalorder %s16, 5
    %p281 = pnand %p279, %p280
    %p282 = pneg %p281
    // Predicated region
    $region9: #{shuffle_unit.1} parent=5 // pred_check
      _
    $region10: #{shuffle_unit.1} parent=5 // pred_check_branch
      %284 = sbr.rel (%p281) target = $region12
    $region11: #{shuffle_unit.1} parent=5 // pred_region
      %s285 = ssub.s32 %s16, 1
      // Predicated region
      $region13: #{shuffle_unit.1} parent=11 // pred_check
        %p286 = pneg %p75
      $region14: #{shuffle_unit.1} parent=11 // pred_check_branch
        %288 = sbr.rel (%p286) target = $region16
      $region15: #{shuffle_unit.1} parent=11 // pred_region
        _
      $region16: #{shuffle_unit.1} parent=11 // pred_fallthru
        _
      // Predicated region
      $region17: #{shuffle_unit.1} parent=11 // pred_check
        %p289 = pneg %p96
      $region18: #{shuffle_unit.1} parent=11 // pred_check_branch
        %291 = sbr.rel (%p289) target = $region20
      $region19: #{shuffle_unit.1} parent=11 // pred_region
        _
      $region20: #{shuffle_unit.1} parent=11 // pred_fallthru
        _
      // Predicated region
      $region21: #{shuffle_unit.1} parent=11 // pred_check
        %p292 = pneg %p117
      $region22: #{shuffle_unit.1} parent=11 // pred_check_branch
        %294 = sbr.rel (%p292) target = $region24
      $region23: #{shuffle_unit.1} parent=11 // pred_region
        _
      $region24: #{shuffle_unit.1} parent=11 // pred_fallthru
        _
      // Predicated region
      $region25: #{shuffle_unit.1} parent=11 // pred_check
        %p295 = pneg %p138
      $region26: #{shuffle_unit.1} parent=11 // pred_check_branch
        %297 = sbr.rel (%p295) target = $region28
      $region27: #{shuffle_unit.1} parent=11 // pred_region
        _
      $region28: #{shuffle_unit.1} parent=11 // pred_fallthru
        _
      // Predicated region
      $region29: #{shuffle_unit.1} parent=11 // pred_check
        %p298 = pneg %p159
      $region30: #{shuffle_unit.1} parent=11 // pred_check_branch
        %300 = sbr.rel (%p298) target = $region32
      $region31: #{shuffle_unit.1} parent=11 // pred_region
        _
      $region32: #{shuffle_unit.1} parent=11 // pred_fallthru
        _
      // Predicated region
      $region33: #{shuffle_unit.1} parent=11 // pred_check
        %p301 = pneg %p180
      $region34: #{shuffle_unit.1} parent=11 // pred_check_branch
        %303 = sbr.rel (%p301) target = $region36
      $region35: #{shuffle_unit.1} parent=11 // pred_region
        _
      $region36: #{shuffle_unit.1} parent=11 // pred_fallthru
        _
      // Predicated region
      $region37: #{shuffle_unit.1} parent=11 // pred_check
        %p304 = pneg %p201
      $region38: #{shuffle_unit.1} parent=11 // pred_check_branch
        %306 = sbr.rel (%p304) target = $region40
      $region39: #{shuffle_unit.1} parent=11 // pred_region
        _
      $region40: #{shuffle_unit.1} parent=11 // pred_fallthru
        _
      // Predicated region
      $region41: #{shuffle_unit.1} parent=11 // pred_check
        %p307 = pneg %p222
      $region42: #{shuffle_unit.1} parent=11 // pred_check_branch
        %309 = sbr.rel (%p307) target = $region44
      $region43: #{shuffle_unit.1} parent=11 // pred_region
        _
      $region44: #{shuffle_unit.1} parent=11 // pred_fallthru
        _
      // Predicated region
      $region45: #{shuffle_unit.1} parent=11 // pred_check
        %p310 = pneg %p243
      $region46: #{shuffle_unit.1} parent=11 // pred_check_branch
        %312 = sbr.rel (%p310) target = $region48
      $region47: #{shuffle_unit.1} parent=11 // pred_region
        _
      $region48: #{shuffle_unit.1} parent=11 // pred_fallthru
        _
    $region12: #{shuffle_unit.1} parent=5 // pred_fallthru
      _
    %p313 = scmp.lt.s32.totalorder %s16, 4
    // Predicated region
    $region49: #{shuffle_unit.1} parent=5 // pred_check
      %p314 = pneg %p313
    $region50: #{shuffle_unit.1} parent=5 // pred_check_branch
      %316 = sbr.rel (%p314) target = $region52
    $region51: #{shuffle_unit.1} parent=5 // pred_region
      // Predicated region
      $region53: #{shuffle_unit.1} parent=51 // pred_check
        %p317 = pneg %p48
      $region54: #{shuffle_unit.1} parent=51 // pred_check_branch
        %319 = sbr.rel (%p317) target = $region56
      $region55: #{shuffle_unit.1} parent=51 // pred_region
        %p320 = scmp.lt.s32.totalorder %s23, 1
        %s321 = scalar_select %p320, %s23, 1
        %s322 = smul.addr %s321, 32
        %s323 = smul.addr %s322, 8
        %s324 = scalar_lea.vmem %s0, %s323
      $region56: #{shuffle_unit.1} parent=51 // pred_fallthru
        _
    $region52: #{shuffle_unit.1} parent=5 // pred_fallthru
      _
    %p325 = scmp.le.s32.totalorder 1, %s16
    %p326 = scmp.lt.s32.totalorder %s16, 5
    %p327 = pnand %p325, %p326
    %p328 = pneg %p327
    // Predicated region
    $region57: #{shuffle_unit.1} parent=5 // pred_check
      _
    $region58: #{shuffle_unit.1} parent=5 // pred_check_branch
      %330 = sbr.rel (%p327) target = $region60
    $region59: #{shuffle_unit.1} parent=5 // pred_region
      %s331 = ssub.s32 %s16, 1
      %p332 = scmp.lt.s32.totalorder %s25, 1
      %s333 = scalar_select %p332, %s25, 1
      %s334 = smul.addr %s333, 32
      %s335 = smul.addr %s334, 8
      %s336 = scalar_lea.vmem %s0, %s335
      %p337 = pneg %p54
      %p338 = pneg %p51
      %p339 = pneg %p75
      %p340 = pneg %p72
      %p341 = pneg %p96
      %p342 = pneg %p93
      %p343 = pneg %p117
      %p344 = pneg %p114
      %p345 = pneg %p138
      %p346 = pneg %p135
      %p347 = pneg %p159
      %p348 = pneg %p156
      %p349 = pneg %p180
      %p350 = pneg %p177
      %p351 = pneg %p201
      %p352 = pneg %p198
      %p353 = pneg %p222
      %p354 = pneg %p219
      %p355 = pneg %p243
      %p356 = pneg %p240
      %p357 = pneg %p271
      %p358 = pneg %p268
      %s359 = smul.u32 8, %s26
      %p360 = scmp.lt.s32.totalorder %s25, 1
      %s361 = scalar_select %p360, %s25, 1
      %p362 = scmp.lt.s32.totalorder %s359, 15
      %s363 = scalar_select %p362, %s359, 15
      %s364 = smul.addr %s363, 2
      %s365 = smul.addr %s361, 32
      %s366 = sadd.s32 %s364, %s365
      %s367 = smul.addr %s366, 8
      %s368 = scalar_lea.vmem %s10, %s367
      %p369 = scmp.lt.s32.totalorder %s25, 1
      %s370 = scalar_select %p369, %s25, 1
      %s371 = smul.addr %s370, 32
      %s372 = smul.addr %s371, 8
      %s373 = scalar_lea.vmem %s0, %s372
      %s374 = smul.u32 8, %s26
      %p375 = scmp.lt.s32.totalorder %s25, 1
      %s376 = scalar_select %p375, %s25, 1
      %p377 = scmp.lt.s32.totalorder %s374, 15
      %s378 = scalar_select %p377, %s374, 15
      %s379 = smul.addr %s378, 2
      %s380 = smul.addr %s376, 32
      %s381 = sadd.s32 %s379, %s380
      %s382 = smul.addr %s381, 8
      %s383 = scalar_lea.vmem %s10, %s382
      %s384 = smul.u32 8, %s26
      %s386 = smul.u32 %s26, 8
      %v387 = vld [vmem:[%s1] sm:$0xf]
      %v388 = vld [vmem:[%s1 + $0x4] sm:$0xf]
      %v389 = vld [vmem:[%s2] sm:$0x1]
      %v390 = vld [vmem:[%s3] sm:$0x1]
      %vm391 = vcmask 64512
      %392 = vst.msk [vmem:[#allocation2] sm:$0xff] %vm391, 0.0
      %393 = vst.msk [vmem:[#allocation2 + $0x8] sm:$0xff] %vm391, 0.0
      %vm394 = vcmask 58368
      %395 = vst.msk [vmem:[#allocation2 + $0x10] sm:$0x3] %vm394, 0.0
      %396 = vst.msk [vmem:[#allocation2 + $0x18] sm:$0xff] %vm391, 0.0
      %397 = vst.msk [vmem:[#allocation2 + $0x20] sm:$0xff] %vm391, 0.0
      %398 = vst.msk [vmem:[#allocation2 + $0x28] sm:$0x3] %vm394, 0.0
      %399 = vst.msk [vmem:[#allocation2 + $0x30] sm:$0xff] %vm391, 0.0
      %400 = vst.msk [vmem:[#allocation2 + $0x38] sm:$0xff] %vm391, 0.0
      %401 = vst.msk [vmem:[#allocation2 + $0x40] sm:$0x3] %vm394, 0.0
      %402 = vst.msk [vmem:[#allocation2 + $0x48] sm:$0xff] %vm391, 0.0
      %403 = vst.msk [vmem:[#allocation2 + $0x50] sm:$0xff] %vm391, 0.0
      %404 = vst.msk [vmem:[#allocation2 + $0x58] sm:$0x3] %vm394, 0.0
      %405 = vst.msk [vmem:[#allocation2 + $0x60] sm:$0xff] %vm391, 0.0
      %406 = vst.msk [vmem:[#allocation2 + $0x68] sm:$0xff] %vm391, 0.0
      %407 = vst.msk [vmem:[#allocation2 + $0x70] sm:$0x3] %vm394, 0.0
      %408 = vst.msk [vmem:[#allocation2 + $0x78] sm:$0xff] %vm391, 0.0
      %409 = vst.msk [vmem:[#allocation2 + $0x80] sm:$0xff] %vm391, 0.0
      %410 = vst.msk [vmem:[#allocation2 + $0x88] sm:$0x3] %vm394, 0.0
      %411 = vst.msk [vmem:[#allocation2 + $0x90] sm:$0xff] %vm391, 0.0
      %412 = vst.msk [vmem:[#allocation2 + $0x98] sm:$0xff] %vm391, 0.0
      %413 = vst.msk [vmem:[#allocation2 + $0xa0] sm:$0x3] %vm394, 0.0
      %414 = vst.msk [vmem:[#allocation2 + $0xa8] sm:$0xff] %vm391, 0.0
      %415 = vst.msk [vmem:[#allocation2 + $0xb0] sm:$0xff] %vm391, 0.0
      %416 = vst.msk [vmem:[#allocation2 + $0xb8] sm:$0x3] %vm394, 0.0
      %417 = vst.msk [vmem:[#allocation2 + $0xc0] sm:$0xff] %vm391, 0.0
      %418 = vst.msk [vmem:[#allocation2 + $0xc8] sm:$0xff] %vm391, 0.0
      %419 = vst.msk [vmem:[#allocation2 + $0xd0] sm:$0x3] %vm394, 0.0
      %420 = vst.msk [vmem:[#allocation2 + $0xd8] sm:$0xff] %vm391, 0.0
      %421 = vst.msk [vmem:[#allocation2 + $0xe0] sm:$0xff] %vm391, 0.0
      %422 = vst.msk [vmem:[#allocation2 + $0xe8] sm:$0x3] %vm394, 0.0
      %s423 = smul.u32 %s386, 16
      %s424 = scalar_lea.vmem %s373, %s423
      %v425 = vld [vmem:[%s424] sm:$0xff]
      %v426 = vld [vmem:[%s424 + $0x8] sm:$0xff]
      %v427 = vld [vmem:[%s424 + $0x10] sm:$0xff]
      %v428 = vld [vmem:[%s424 + $0x18] sm:$0xff]
      %v429 = vld [vmem:[%s424 + $0x20] sm:$0xff]
      %v430 = vld [vmem:[%s424 + $0x28] sm:$0xff]
      %v431 = vld [vmem:[%s424 + $0x30] sm:$0xff]
      %v432 = vld [vmem:[%s424 + $0x38] sm:$0xff]
      %v433 = vld [vmem:[%s424 + $0x40] sm:$0xff]
      %v434 = vld [vmem:[%s424 + $0x48] sm:$0xff]
      %v435 = vld [vmem:[%s424 + $0x50] sm:$0xff]
      %v436 = vld [vmem:[%s424 + $0x58] sm:$0xff]
      %v437 = vld [vmem:[%s424 + $0x60] sm:$0xff]
      %v438 = vld [vmem:[%s424 + $0x68] sm:$0xff]
      %v439 = vld [vmem:[%s424 + $0x70] sm:$0xff]
      %v440 = vld [vmem:[%s424 + $0x78] sm:$0xff]
      %v441 = vpack.c.bf16 %v426, %v425
      %v442 = vpack.c.bf16 %v428, %v427
      %v443 = vpack.c.bf16 %v430, %v429
      %v444 = vpack.c.bf16 %v432, %v431
      %v445 = vpack.c.bf16 %v434, %v433
      %v446 = vpack.c.bf16 %v436, %v435
      %v447 = vpack.c.bf16 %v438, %v437
      %v448 = vpack.c.bf16 %v440, %v439
      %v451 = vunpack.c.l.b16 %v387
      %v452 = vunpack.c.l.b16 %v388
      %v453 = vpack.c.b16 %v452, %v451
      %vm455 = vcmask 130048
      %v457 = vsel %vm455, %v441, 0
      %v460 = vsel %vm455, %v442, 0
      %v463 = vsel %vm455, %v443, 0
      %v466 = vsel %vm455, %v444, 0
      %v469 = vsel %vm455, %v445, 0
      %v472 = vsel %vm455, %v446, 0
      %v475 = vsel %vm455, %v447, 0
      %v478 = vsel %vm455, %v448, 0
      %480 = vmatpush.bf16.msra.mxu0 0
      %481 = vmatpush.bf16.msra.mxu0 0
      %482 = vmatpush.bf16.msra.mxu0 0
      %483 = vmatpush.bf16.msra.mxu0 0
      %484 = vmatpush.bf16.msra.mxu0 0
      %485 = vmatpush.bf16.msra.mxu0 0
      %486 = vmatpush.bf16.msra.mxu0 0
      %487 = vmatpush.bf16.msra.mxu0 %v453
      %488 = vmatmul.bf16.gmra.mxu0 %v457
      %v489 = vpop.f32.mrf.mxu0
      %v490 = vadd.f32 0.0, %v489
      %v491 = vpop.f32.mrf.mxu0
      %v492 = vadd.f32 0.0, %v491
      %493 = vmatmul.bf16.gmra.mxu0 %v460
      %v494 = vpop.f32.mrf.mxu0
      %v495 = vadd.f32 0.0, %v494
      %v496 = vpop.f32.mrf.mxu0
      %v497 = vadd.f32 0.0, %v496
      %498 = vmatmul.bf16.gmra.mxu0 %v463
      %v499 = vpop.f32.mrf.mxu0
      %v500 = vadd.f32 0.0, %v499
      %v501 = vpop.f32.mrf.mxu0
      %v502 = vadd.f32 0.0, %v501
      %503 = vmatmul.bf16.gmra.mxu0 %v466
      %v504 = vpop.f32.mrf.mxu0
      %v505 = vadd.f32 0.0, %v504
      %v506 = vpop.f32.mrf.mxu0
      %v507 = vadd.f32 0.0, %v506
      %508 = vmatmul.bf16.gmra.mxu0 %v469
      %v509 = vpop.f32.mrf.mxu0
      %v510 = vadd.f32 0.0, %v509
      %v511 = vpop.f32.mrf.mxu0
      %v512 = vadd.f32 0.0, %v511
      %513 = vmatmul.bf16.gmra.mxu0 %v472
      %v514 = vpop.f32.mrf.mxu0
      %v515 = vadd.f32 0.0, %v514
      %v516 = vpop.f32.mrf.mxu0
      %v517 = vadd.f32 0.0, %v516
      %518 = vmatmul.bf16.gmra.mxu0 %v475
      %v519 = vpop.f32.mrf.mxu0
      %v520 = vadd.f32 0.0, %v519
      %v521 = vpop.f32.mrf.mxu0
      %v522 = vadd.f32 0.0, %v521
      %523 = vmatmul.bf16.gmra.mxu0 %v478
      %v524 = vpop.f32.mrf.mxu0
      %v525 = vadd.f32 0.0, %v524
      %v526 = vpop.f32.mrf.mxu0
      %v527 = vadd.f32 0.0, %v526
      %528 = vdwg.mxu0
      %v530 = vperm.slane %v389, 0
      %v532 = vmul.f32 %v490, %v530
      %v533 = vmul.f32 %v492, %v530
      %v534 = vmul.f32 %v495, %v530
      %v535 = vmul.f32 %v497, %v530
      %v536 = vmul.f32 %v500, %v530
      %v537 = vmul.f32 %v502, %v530
      %v538 = vmul.f32 %v505, %v530
      %v539 = vmul.f32 %v507, %v530
      %v540 = vmul.f32 %v510, %v530
      %v541 = vmul.f32 %v512, %v530
      %v542 = vmul.f32 %v515, %v530
      %v543 = vmul.f32 %v517, %v530
      %v544 = vmul.f32 %v520, %v530
      %v545 = vmul.f32 %v522, %v530
      %v546 = vmul.f32 %v525, %v530
      %v547 = vmul.f32 %v527, %v530
      %v549 = vperm.slane %v390, 0
      %v551 = vadd.f32 %v532, %v549
      %v552 = vadd.f32 %v533, %v549
      %v553 = vadd.f32 %v534, %v549
      %v554 = vadd.f32 %v535, %v549
      %v555 = vadd.f32 %v536, %v549
      %v556 = vadd.f32 %v537, %v549
      %v557 = vadd.f32 %v538, %v549
      %v558 = vadd.f32 %v539, %v549
      %v559 = vadd.f32 %v540, %v549
      %v560 = vadd.f32 %v541, %v549
      %v561 = vadd.f32 %v542, %v549
      %v562 = vadd.f32 %v543, %v549
      %v563 = vadd.f32 %v544, %v549
      %v564 = vadd.f32 %v545, %v549
      %v565 = vadd.f32 %v546, %v549
      %v566 = vadd.f32 %v547, %v549
      %v567 = vmax.f32 %v551, 0.0
      %v568 = vmax.f32 %v552, 0.0
      %v569 = vmax.f32 %v553, 0.0
      %v570 = vmax.f32 %v554, 0.0
      %v571 = vmax.f32 %v555, 0.0
      %v572 = vmax.f32 %v556, 0.0
      %v573 = vmax.f32 %v557, 0.0
      %v574 = vmax.f32 %v558, 0.0
      %v575 = vmax.f32 %v559, 0.0
      %v576 = vmax.f32 %v560, 0.0
      %v577 = vmax.f32 %v561, 0.0
      %v578 = vmax.f32 %v562, 0.0
      %v579 = vmax.f32 %v563, 0.0
      %v580 = vmax.f32 %v564, 0.0
      %v581 = vmax.f32 %v565, 0.0
      %v582 = vmax.f32 %v566, 0.0
      %s583 = scalar_lea.vmem [#allocation2], 24
      %584 = vst.msk [vmem:[%s583 + $0x1] sm:$0xff] %vm391, %v567
      %585 = vst.msk [vmem:[%s583 + $0x9] sm:$0xff] %vm391, %v568
      %586 = vst.msk [vmem:[%s583 + $0x19] sm:$0xff] %vm391, %v569
      %587 = vst.msk [vmem:[%s583 + $0x21] sm:$0xff] %vm391, %v570
      %588 = vst.msk [vmem:[%s583 + $0x31] sm:$0xff] %vm391, %v571
      %589 = vst.msk [vmem:[%s583 + $0x39] sm:$0xff] %vm391, %v572
      %590 = vst.msk [vmem:[%s583 + $0x49] sm:$0xff] %vm391, %v573
      %591 = vst.msk [vmem:[%s583 + $0x51] sm:$0xff] %vm391, %v574
      %592 = vst.msk [vmem:[%s583 + $0x61] sm:$0xff] %vm391, %v575
      %593 = vst.msk [vmem:[%s583 + $0x69] sm:$0xff] %vm391, %v576
      %594 = vst.msk [vmem:[%s583 + $0x79] sm:$0xff] %vm391, %v577
      %595 = vst.msk [vmem:[%s583 + $0x81] sm:$0xff] %vm391, %v578
      %596 = vst.msk [vmem:[%s583 + $0x91] sm:$0xff] %vm391, %v579
      %597 = vst.msk [vmem:[%s583 + $0x99] sm:$0xff] %vm391, %v580
      %598 = vst.msk [vmem:[%s583 + $0xa9] sm:$0xff] %vm391, %v581
      %599 = vst.msk [vmem:[%s583 + $0xb1] sm:$0xff] %vm391, %v582
      %p600 = scmp.gt.s32.totalorder %s26, 0
      // Predicated region
      $region61: #{shuffle_unit.1} parent=59 // pred_check
        %p601 = pneg %p600
      $region62: #{shuffle_unit.1} parent=59 // pred_check_branch
        %603 = sbr.rel (%p601) target = $region64
      $region63: #{shuffle_unit.1} parent=59 // pred_region
        %s604 = ssub.s32 %s386, 1
        %s605 = smul.u32 %s604, 16
        %s606 = scalar_lea.vmem %s373, %s605
        %v607 = vld [vmem:[%s606] sm:$0xff]
        %v608 = vld [vmem:[%s606 + $0x8] sm:$0xff]
        %v609 = vpack.c.bf16 %v608, %v607
        %v611 = vsel %vm455, %v609, 0
        %613 = vmatpush.bf16.msra.mxu0 0
        %614 = vmatpush.bf16.msra.mxu0 0
        %615 = vmatpush.bf16.msra.mxu0 0
        %616 = vmatpush.bf16.msra.mxu0 0
        %617 = vmatpush.bf16.msra.mxu0 0
        %618 = vmatpush.bf16.msra.mxu0 0
        %619 = vmatpush.bf16.msra.mxu0 0
        %620 = vmatpush.bf16.msra.mxu0 %v453
        %621 = vmatmul.bf16.gmra.mxu0 %v611
        %v622 = vpop.f32.mrf.mxu0
        %v623 = vadd.f32 0.0, %v622
        %v624 = vpop.f32.mrf.mxu0
        %v625 = vadd.f32 0.0, %v624
        %626 = vdwg.mxu0
        %v627 = vmul.f32 %v623, %v530
        %v628 = vmul.f32 %v625, %v530
        %v629 = vadd.f32 %v627, %v549
        %v630 = vadd.f32 %v628, %v549
        %v631 = vmax.f32 %v629, 0.0
        %v632 = vmax.f32 %v630, 0.0
        %633 = vst.msk [vmem:[#allocation2 + $0x1] sm:$0xff] %vm391, %v631
        %634 = vst.msk [vmem:[#allocation2 + $0x9] sm:$0xff] %vm391, %v632
      $region64: #{shuffle_unit.1} parent=59 // pred_fallthru
        _
      %p635 = scmp.lt.s32.totalorder %s26, 1
      // Predicated region
      $region65: #{shuffle_unit.1} parent=59 // pred_check
        %p636 = pneg %p635
      $region66: #{shuffle_unit.1} parent=59 // pred_check_branch
        %638 = sbr.rel (%p636) target = $region68
      $region67: #{shuffle_unit.1} parent=59 // pred_region
        %s639 = sadd.s32 %s386, 8
        %s640 = smul.u32 %s639, 16
        %s641 = scalar_lea.vmem %s373, %s640
        %v642 = vld [vmem:[%s641] sm:$0xff]
        %v643 = vld [vmem:[%s641 + $0x8] sm:$0xff]
        %v644 = vpack.c.bf16 %v643, %v642
        %v646 = vsel %vm455, %v644, 0
        %648 = vmatpush.bf16.msra.mxu0 0
        %649 = vmatpush.bf16.msra.mxu0 0
        %650 = vmatpush.bf16.msra.mxu0 0
        %651 = vmatpush.bf16.msra.mxu0 0
        %652 = vmatpush.bf16.msra.mxu0 0
        %653 = vmatpush.bf16.msra.mxu0 0
        %654 = vmatpush.bf16.msra.mxu0 0
        %655 = vmatpush.bf16.msra.mxu0 %v453
        %656 = vmatmul.bf16.gmra.mxu0 %v646
        %v657 = vpop.f32.mrf.mxu0
        %v658 = vadd.f32 0.0, %v657
        %v659 = vpop.f32.mrf.mxu0
        %v660 = vadd.f32 0.0, %v659
        %661 = vdwg.mxu0
        %v662 = vmul.f32 %v658, %v530
        %v663 = vmul.f32 %v660, %v530
        %v664 = vadd.f32 %v662, %v549
        %v665 = vadd.f32 %v663, %v549
        %v666 = vmax.f32 %v664, 0.0
        %v667 = vmax.f32 %v665, 0.0
        %s668 = scalar_lea.vmem [#allocation2], 216
        %669 = vst.msk [vmem:[%s668 + $0x1] sm:$0xff] %vm391, %v666
        %670 = vst.msk [vmem:[%s668 + $0x9] sm:$0xff] %vm391, %v667
      $region68: #{shuffle_unit.1} parent=59 // pred_fallthru
        _
      %v671 = vld [vmem:[#allocation2] sm:$0xff]
      %v672 = vld [vmem:[#allocation2 + $0x8] sm:$0xff]
      %v673 = vld [vmem:[#allocation2 + $0x18] sm:$0xff]
      %v674 = vld [vmem:[#allocation2 + $0x20] sm:$0xff]
      %v675 = vld [vmem:[#allocation2 + $0x30] sm:$0xff]
      %v676 = vld [vmem:[#allocation2 + $0x38] sm:$0xff]
      %v677 = vld [vmem:[#allocation2 + $0x48] sm:$0xff]
      %v678 = vld [vmem:[#allocation2 + $0x50] sm:$0xff]
      %v679 = vld [vmem:[#allocation2 + $0x60] sm:$0xff]
      %v680 = vld [vmem:[#allocation2 + $0x68] sm:$0xff]
      %v681 = vld [vmem:[#allocation2 + $0x78] sm:$0xff]
      %v682 = vld [vmem:[#allocation2 + $0x80] sm:$0xff]
      %v683 = vld [vmem:[#allocation2 + $0x90] sm:$0xff]
      %v684 = vld [vmem:[#allocation2 + $0x98] sm:$0xff]
      %v685 = vld [vmem:[#allocation2 + $0xa8] sm:$0xff]
      %v686 = vld [vmem:[#allocation2 + $0xb0] sm:$0xff]
      %v687 = vld [vmem:[%s4] sm:$0x1]
      %v688 = vperm.slane %v687, 0
      %v689 = vmul.f32 %v671, %v688
      %v690 = vmul.f32 %v672, %v688
      %v691 = vmul.f32 %v673, %v688
      %v692 = vmul.f32 %v674, %v688
      %v693 = vmul.f32 %v675, %v688
      %v694 = vmul.f32 %v676, %v688
      %v695 = vmul.f32 %v677, %v688
      %v696 = vmul.f32 %v678, %v688
      %v697 = vmul.f32 %v679, %v688
      %v698 = vmul.f32 %v680, %v688
      %v699 = vmul.f32 %v681, %v688
      %v700 = vmul.f32 %v682, %v688
      %v701 = vmul.f32 %v683, %v688
      %v702 = vmul.f32 %v684, %v688
      %v703 = vmul.f32 %v685, %v688
      %v704 = vmul.f32 %v686, %v688
      %v705 = vadd.f32 %v689, 0.0
      %v706 = vadd.f32 %v690, 0.0
      %v707 = vadd.f32 %v691, 0.0
      %v708 = vadd.f32 %v692, 0.0
      %v709 = vadd.f32 %v693, 0.0
      %v710 = vadd.f32 %v694, 0.0
      %v711 = vadd.f32 %v695, 0.0
      %v712 = vadd.f32 %v696, 0.0
      %v713 = vadd.f32 %v697, 0.0
      %v714 = vadd.f32 %v698, 0.0
      %v715 = vadd.f32 %v699, 0.0
      %v716 = vadd.f32 %v700, 0.0
      %v717 = vadd.f32 %v701, 0.0
      %v718 = vadd.f32 %v702, 0.0
      %v719 = vadd.f32 %v703, 0.0
      %v720 = vadd.f32 %v704, 0.0
      %v721 = vld [vmem:[#allocation2 + $0x1] sm:$0xff]
      %v722 = vld [vmem:[#allocation2 + $0x9] sm:$0xff]
      %v723 = vld [vmem:[#allocation2 + $0x19] sm:$0xff]
      %v724 = vld [vmem:[#allocation2 + $0x21] sm:$0xff]
      %v725 = vld [vmem:[#allocation2 + $0x31] sm:$0xff]
      %v726 = vld [vmem:[#allocation2 + $0x39] sm:$0xff]
      %v727 = vld [vmem:[#allocation2 + $0x49] sm:$0xff]
      %v728 = vld [vmem:[#allocation2 + $0x51] sm:$0xff]
      %v729 = vld [vmem:[#allocation2 + $0x61] sm:$0xff]
      %v730 = vld [vmem:[#allocation2 + $0x69] sm:$0xff]
      %v731 = vld [vmem:[#allocation2 + $0x79] sm:$0xff]
      %v732 = vld [vmem:[#allocation2 + $0x81] sm:$0xff]
      %v733 = vld [vmem:[#allocation2 + $0x91] sm:$0xff]
      %v734 = vld [vmem:[#allocation2 + $0x99] sm:$0xff]
      %v735 = vld [vmem:[#allocation2 + $0xa9] sm:$0xff]
      %v736 = vld [vmem:[#allocation2 + $0xb1] sm:$0xff]
      %v737 = vld [vmem:[%s4 + $0x1] sm:$0x1]
      %v738 = vperm.slane %v737, 0
      %v739 = vmul.f32 %v721, %v738
      %v740 = vmul.f32 %v722, %v738
      %v741 = vmul.f32 %v723, %v738
      %v742 = vmul.f32 %v724, %v738
      %v743 = vmul.f32 %v725, %v738
      %v744 = vmul.f32 %v726, %v738
      %v745 = vmul.f32 %v727, %v738
      %v746 = vmul.f32 %v728, %v738
      %v747 = vmul.f32 %v729, %v738
      %v748 = vmul.f32 %v730, %v738
      %v749 = vmul.f32 %v731, %v738
      %v750 = vmul.f32 %v732, %v738
      %v751 = vmul.f32 %v733, %v738
      %v752 = vmul.f32 %v734, %v738
      %v753 = vmul.f32 %v735, %v738
      %v754 = vmul.f32 %v736, %v738
      %v755 = vadd.f32 %v705, %v739
      %v756 = vadd.f32 %v706, %v740
      %v757 = vadd.f32 %v707, %v741
      %v758 = vadd.f32 %v708, %v742
      %v759 = vadd.f32 %v709, %v743
      %v760 = vadd.f32 %v710, %v744
      %v761 = vadd.f32 %v711, %v745
      %v762 = vadd.f32 %v712, %v746
      %v763 = vadd.f32 %v713, %v747
      %v764 = vadd.f32 %v714, %v748
      %v765 = vadd.f32 %v715, %v749
      %v766 = vadd.f32 %v716, %v750
      %v767 = vadd.f32 %v717, %v751
      %v768 = vadd.f32 %v718, %v752
      %v769 = vadd.f32 %v719, %v753
      %v770 = vadd.f32 %v720, %v754
      %v771 = vld [vmem:[#allocation2 + $0x2] sm:$0xff]
      %v772 = vld [vmem:[#allocation2 + $0xa] sm:$0xff]
      %v773 = vld [vmem:[#allocation2 + $0x1a] sm:$0xff]
      %v774 = vld [vmem:[#allocation2 + $0x22] sm:$0xff]
      %v775 = vld [vmem:[#allocation2 + $0x32] sm:$0xff]
      %v776 = vld [vmem:[#allocation2 + $0x3a] sm:$0xff]
      %v777 = vld [vmem:[#allocation2 + $0x4a] sm:$0xff]
      %v778 = vld [vmem:[#allocation2 + $0x52] sm:$0xff]
      %v779 = vld [vmem:[#allocation2 + $0x62] sm:$0xff]
      %v780 = vld [vmem:[#allocation2 + $0x6a] sm:$0xff]
      %v781 = vld [vmem:[#allocation2 + $0x7a] sm:$0xff]
      %v782 = vld [vmem:[#allocation2 + $0x82] sm:$0xff]
      %v783 = vld [vmem:[#allocation2 + $0x92] sm:$0xff]
      %v784 = vld [vmem:[#allocation2 + $0x9a] sm:$0xff]
      %v785 = vld [vmem:[#allocation2 + $0xaa] sm:$0xff]
      %v786 = vld [vmem:[#allocation2 + $0xb2] sm:$0xff]
      %v787 = vld [vmem:[%s4 + $0x2] sm:$0x1]
      %v788 = vperm.slane %v787, 0
      %v789 = vmul.f32 %v771, %v788
      %v790 = vmul.f32 %v772, %v788
      %v791 = vmul.f32 %v773, %v788
      %v792 = vmul.f32 %v774, %v788
      %v793 = vmul.f32 %v775, %v788
      %v794 = vmul.f32 %v776, %v788
      %v795 = vmul.f32 %v777, %v788
      %v796 = vmul.f32 %v778, %v788
      %v797 = vmul.f32 %v779, %v788
      %v798 = vmul.f32 %v780, %v788
      %v799 = vmul.f32 %v781, %v788
      %v800 = vmul.f32 %v782, %v788
      %v801 = vmul.f32 %v783, %v788
      %v802 = vmul.f32 %v784, %v788
      %v803 = vmul.f32 %v785, %v788
      %v804 = vmul.f32 %v786, %v788
      %v805 = vadd.f32 %v755, %v789
      %v806 = vadd.f32 %v756, %v790
      %v807 = vadd.f32 %v757, %v791
      %v808 = vadd.f32 %v758, %v792
      %v809 = vadd.f32 %v759, %v793
      %v810 = vadd.f32 %v760, %v794
      %v811 = vadd.f32 %v761, %v795
      %v812 = vadd.f32 %v762, %v796
      %v813 = vadd.f32 %v763, %v797
      %v814 = vadd.f32 %v764, %v798
      %v815 = vadd.f32 %v765, %v799
      %v816 = vadd.f32 %v766, %v800
      %v817 = vadd.f32 %v767, %v801
      %v818 = vadd.f32 %v768, %v802
      %v819 = vadd.f32 %v769, %v803
      %v820 = vadd.f32 %v770, %v804
      %v821 = vld [vmem:[%s583] sm:$0xff]
      %v822 = vld [vmem:[%s583 + $0x8] sm:$0xff]
      %v823 = vld [vmem:[%s583 + $0x18] sm:$0xff]
      %v824 = vld [vmem:[%s583 + $0x20] sm:$0xff]
      %v825 = vld [vmem:[%s583 + $0x30] sm:$0xff]
      %v826 = vld [vmem:[%s583 + $0x38] sm:$0xff]
      %v827 = vld [vmem:[%s583 + $0x48] sm:$0xff]
      %v828 = vld [vmem:[%s583 + $0x50] sm:$0xff]
      %v829 = vld [vmem:[%s583 + $0x60] sm:$0xff]
      %v830 = vld [vmem:[%s583 + $0x68] sm:$0xff]
      %v831 = vld [vmem:[%s583 + $0x78] sm:$0xff]
      %v832 = vld [vmem:[%s583 + $0x80] sm:$0xff]
      %v833 = vld [vmem:[%s583 + $0x90] sm:$0xff]
      %v834 = vld [vmem:[%s583 + $0x98] sm:$0xff]
      %v835 = vld [vmem:[%s583 + $0xa8] sm:$0xff]
      %v836 = vld [vmem:[%s583 + $0xb0] sm:$0xff]
      %v837 = vld [vmem:[%s4 + $0x3] sm:$0x1]
      %v838 = vperm.slane %v837, 0
      %v839 = vmul.f32 %v821, %v838
      %v840 = vmul.f32 %v822, %v838
      %v841 = vmul.f32 %v823, %v838
      %v842 = vmul.f32 %v824, %v838
      %v843 = vmul.f32 %v825, %v838
      %v844 = vmul.f32 %v826, %v838
      %v845 = vmul.f32 %v827, %v838
      %v846 = vmul.f32 %v828, %v838
      %v847 = vmul.f32 %v829, %v838
      %v848 = vmul.f32 %v830, %v838
      %v849 = vmul.f32 %v831, %v838
      %v850 = vmul.f32 %v832, %v838
      %v851 = vmul.f32 %v833, %v838
      %v852 = vmul.f32 %v834, %v838
      %v853 = vmul.f32 %v835, %v838
      %v854 = vmul.f32 %v836, %v838
      %v855 = vadd.f32 %v805, %v839
      %v856 = vadd.f32 %v806, %v840
      %v857 = vadd.f32 %v807, %v841
      %v858 = vadd.f32 %v808, %v842
      %v859 = vadd.f32 %v809, %v843
      %v860 = vadd.f32 %v810, %v844
      %v861 = vadd.f32 %v811, %v845
      %v862 = vadd.f32 %v812, %v846
      %v863 = vadd.f32 %v813, %v847
      %v864 = vadd.f32 %v814, %v848
      %v865 = vadd.f32 %v815, %v849
      %v866 = vadd.f32 %v816, %v850
      %v867 = vadd.f32 %v817, %v851
      %v868 = vadd.f32 %v818, %v852
      %v869 = vadd.f32 %v819, %v853
      %v870 = vadd.f32 %v820, %v854
      %v871 = vld [vmem:[%s583 + $0x1] sm:$0xff]
      %v872 = vld [vmem:[%s583 + $0x9] sm:$0xff]
      %v873 = vld [vmem:[%s583 + $0x19] sm:$0xff]
      %v874 = vld [vmem:[%s583 + $0x21] sm:$0xff]
      %v875 = vld [vmem:[%s583 + $0x31] sm:$0xff]
      %v876 = vld [vmem:[%s583 + $0x39] sm:$0xff]
      %v877 = vld [vmem:[%s583 + $0x49] sm:$0xff]
      %v878 = vld [vmem:[%s583 + $0x51] sm:$0xff]
      %v879 = vld [vmem:[%s583 + $0x61] sm:$0xff]
      %v880 = vld [vmem:[%s583 + $0x69] sm:$0xff]
      %v881 = vld [vmem:[%s583 + $0x79] sm:$0xff]
      %v882 = vld [vmem:[%s583 + $0x81] sm:$0xff]
      %v883 = vld [vmem:[%s583 + $0x91] sm:$0xff]
      %v884 = vld [vmem:[%s583 + $0x99] sm:$0xff]
      %v885 = vld [vmem:[%s583 + $0xa9] sm:$0xff]
      %v886 = vld [vmem:[%s583 + $0xb1] sm:$0xff]
      %v887 = vld [vmem:[%s4 + $0x4] sm:$0x1]
      %v888 = vperm.slane %v887, 0
      %v889 = vmul.f32 %v871, %v888
      %v890 = vmul.f32 %v872, %v888
      %v891 = vmul.f32 %v873, %v888
      %v892 = vmul.f32 %v874, %v888
      %v893 = vmul.f32 %v875, %v888
      %v894 = vmul.f32 %v876, %v888
      %v895 = vmul.f32 %v877, %v888
      %v896 = vmul.f32 %v878, %v888
      %v897 = vmul.f32 %v879, %v888
      %v898 = vmul.f32 %v880, %v888
      %v899 = vmul.f32 %v881, %v888
      %v900 = vmul.f32 %v882, %v888
      %v901 = vmul.f32 %v883, %v888
      %v902 = vmul.f32 %v884, %v888
      %v903 = vmul.f32 %v885, %v888
      %v904 = vmul.f32 %v886, %v888
      %v905 = vadd.f32 %v855, %v889
      %v906 = vadd.f32 %v856, %v890
      %v907 = vadd.f32 %v857, %v891
      %v908 = vadd.f32 %v858, %v892
      %v909 = vadd.f32 %v859, %v893
      %v910 = vadd.f32 %v860, %v894
      %v911 = vadd.f32 %v861, %v895
      %v912 = vadd.f32 %v862, %v896
      %v913 = vadd.f32 %v863, %v897
      %v914 = vadd.f32 %v864, %v898
      %v915 = vadd.f32 %v865, %v899
      %v916 = vadd.f32 %v866, %v900
      %v917 = vadd.f32 %v867, %v901
      %v918 = vadd.f32 %v868, %v902
      %v919 = vadd.f32 %v869, %v903
      %v920 = vadd.f32 %v870, %v904
      %v921 = vld [vmem:[%s583 + $0x2] sm:$0xff]
      %v922 = vld [vmem:[%s583 + $0xa] sm:$0xff]
      %v923 = vld [vmem:[%s583 + $0x1a] sm:$0xff]
      %v924 = vld [vmem:[%s583 + $0x22] sm:$0xff]
      %v925 = vld [vmem:[%s583 + $0x32] sm:$0xff]
      %v926 = vld [vmem:[%s583 + $0x3a] sm:$0xff]
      %v927 = vld [vmem:[%s583 + $0x4a] sm:$0xff]
      %v928 = vld [vmem:[%s583 + $0x52] sm:$0xff]
      %v929 = vld [vmem:[%s583 + $0x62] sm:$0xff]
      %v930 = vld [vmem:[%s583 + $0x6a] sm:$0xff]
      %v931 = vld [vmem:[%s583 + $0x7a] sm:$0xff]
      %v932 = vld [vmem:[%s583 + $0x82] sm:$0xff]
      %v933 = vld [vmem:[%s583 + $0x92] sm:$0xff]
      %v934 = vld [vmem:[%s583 + $0x9a] sm:$0xff]
      %v935 = vld [vmem:[%s583 + $0xaa] sm:$0xff]
      %v936 = vld [vmem:[%s583 + $0xb2] sm:$0xff]
      %v937 = vld [vmem:[%s4 + $0x5] sm:$0x1]
      %v938 = vperm.slane %v937, 0
      %v939 = vmul.f32 %v921, %v938
      %v940 = vmul.f32 %v922, %v938
      %v941 = vmul.f32 %v923, %v938
      %v942 = vmul.f32 %v924, %v938
      %v943 = vmul.f32 %v925, %v938
      %v944 = vmul.f32 %v926, %v938
      %v945 = vmul.f32 %v927, %v938
      %v946 = vmul.f32 %v928, %v938
      %v947 = vmul.f32 %v929, %v938
      %v948 = vmul.f32 %v930, %v938
      %v949 = vmul.f32 %v931, %v938
      %v950 = vmul.f32 %v932, %v938
      %v951 = vmul.f32 %v933, %v938
      %v952 = vmul.f32 %v934, %v938
      %v953 = vmul.f32 %v935, %v938
      %v954 = vmul.f32 %v936, %v938
      %v955 = vadd.f32 %v905, %v939
      %v956 = vadd.f32 %v906, %v940
      %v957 = vadd.f32 %v907, %v941
      %v958 = vadd.f32 %v908, %v942
      %v959 = vadd.f32 %v909, %v943
      %v960 = vadd.f32 %v910, %v944
      %v961 = vadd.f32 %v911, %v945
      %v962 = vadd.f32 %v912, %v946
      %v963 = vadd.f32 %v913, %v947
      %v964 = vadd.f32 %v914, %v948
      %v965 = vadd.f32 %v915, %v949
      %v966 = vadd.f32 %v916, %v950
      %v967 = vadd.f32 %v917, %v951
      %v968 = vadd.f32 %v918, %v952
      %v969 = vadd.f32 %v919, %v953
      %v970 = vadd.f32 %v920, %v954
      %s971 = scalar_lea.vmem [#allocation2], 48
      %v972 = vld [vmem:[%s971] sm:$0xff]
      %v973 = vld [vmem:[%s971 + $0x8] sm:$0xff]
      %v974 = vld [vmem:[%s971 + $0x18] sm:$0xff]
      %v975 = vld [vmem:[%s971 + $0x20] sm:$0xff]
      %v976 = vld [vmem:[%s971 + $0x30] sm:$0xff]
      %v977 = vld [vmem:[%s971 + $0x38] sm:$0xff]
      %v978 = vld [vmem:[%s971 + $0x48] sm:$0xff]
      %v979 = vld [vmem:[%s971 + $0x50] sm:$0xff]
      %v980 = vld [vmem:[%s971 + $0x60] sm:$0xff]
      %v981 = vld [vmem:[%s971 + $0x68] sm:$0xff]
      %v982 = vld [vmem:[%s971 + $0x78] sm:$0xff]
      %v983 = vld [vmem:[%s971 + $0x80] sm:$0xff]
      %v984 = vld [vmem:[%s971 + $0x90] sm:$0xff]
      %v985 = vld [vmem:[%s971 + $0x98] sm:$0xff]
      %v986 = vld [vmem:[%s971 + $0xa8] sm:$0xff]
      %v987 = vld [vmem:[%s971 + $0xb0] sm:$0xff]
      %v988 = vld [vmem:[%s4 + $0x6] sm:$0x1]
      %v989 = vperm.slane %v988, 0
      %v990 = vmul.f32 %v972, %v989
      %v991 = vmul.f32 %v973, %v989
      %v992 = vmul.f32 %v974, %v989
      %v993 = vmul.f32 %v975, %v989
      %v994 = vmul.f32 %v976, %v989
      %v995 = vmul.f32 %v977, %v989
      %v996 = vmul.f32 %v978, %v989
      %v997 = vmul.f32 %v979, %v989
      %v998 = vmul.f32 %v980, %v989
      %v999 = vmul.f32 %v981, %v989
      %v1000 = vmul.f32 %v982, %v989
      %v1001 = vmul.f32 %v983, %v989
      %v1002 = vmul.f32 %v984, %v989
      %v1003 = vmul.f32 %v985, %v989
      %v1004 = vmul.f32 %v986, %v989
      %v1005 = vmul.f32 %v987, %v989
      %v1006 = vadd.f32 %v955, %v990
      %v1007 = vadd.f32 %v956, %v991
      %v1008 = vadd.f32 %v957, %v992
      %v1009 = vadd.f32 %v958, %v993
      %v1010 = vadd.f32 %v959, %v994
      %v1011 = vadd.f32 %v960, %v995
      %v1012 = vadd.f32 %v961, %v996
      %v1013 = vadd.f32 %v962, %v997
      %v1014 = vadd.f32 %v963, %v998
      %v1015 = vadd.f32 %v964, %v999
      %v1016 = vadd.f32 %v965, %v1000
      %v1017 = vadd.f32 %v966, %v1001
      %v1018 = vadd.f32 %v967, %v1002
      %v1019 = vadd.f32 %v968, %v1003
      %v1020 = vadd.f32 %v969, %v1004
      %v1021 = vadd.f32 %v970, %v1005
      %v1022 = vld [vmem:[%s971 + $0x1] sm:$0xff]
      %v1023 = vld [vmem:[%s971 + $0x9] sm:$0xff]
      %v1024 = vld [vmem:[%s971 + $0x19] sm:$0xff]
      %v1025 = vld [vmem:[%s971 + $0x21] sm:$0xff]
      %v1026 = vld [vmem:[%s971 + $0x31] sm:$0xff]
      %v1027 = vld [vmem:[%s971 + $0x39] sm:$0xff]
      %v1028 = vld [vmem:[%s971 + $0x49] sm:$0xff]
      %v1029 = vld [vmem:[%s971 + $0x51] sm:$0xff]
      %v1030 = vld [vmem:[%s971 + $0x61] sm:$0xff]
      %v1031 = vld [vmem:[%s971 + $0x69] sm:$0xff]
      %v1032 = vld [vmem:[%s971 + $0x79] sm:$0xff]
      %v1033 = vld [vmem:[%s971 + $0x81] sm:$0xff]
      %v1034 = vld [vmem:[%s971 + $0x91] sm:$0xff]
      %v1035 = vld [vmem:[%s971 + $0x99] sm:$0xff]
      %v1036 = vld [vmem:[%s971 + $0xa9] sm:$0xff]
      %v1037 = vld [vmem:[%s971 + $0xb1] sm:$0xff]
      %v1038 = vld [vmem:[%s4 + $0x7] sm:$0x1]
      %v1039 = vperm.slane %v1038, 0
      %v1040 = vmul.f32 %v1022, %v1039
      %v1041 = vmul.f32 %v1023, %v1039
      %v1042 = vmul.f32 %v1024, %v1039
      %v1043 = vmul.f32 %v1025, %v1039
      %v1044 = vmul.f32 %v1026, %v1039
      %v1045 = vmul.f32 %v1027, %v1039
      %v1046 = vmul.f32 %v1028, %v1039
      %v1047 = vmul.f32 %v1029, %v1039
      %v1048 = vmul.f32 %v1030, %v1039
      %v1049 = vmul.f32 %v1031, %v1039
      %v1050 = vmul.f32 %v1032, %v1039
      %v1051 = vmul.f32 %v1033, %v1039
      %v1052 = vmul.f32 %v1034, %v1039
      %v1053 = vmul.f32 %v1035, %v1039
      %v1054 = vmul.f32 %v1036, %v1039
      %v1055 = vmul.f32 %v1037, %v1039
      %v1056 = vadd.f32 %v1006, %v1040
      %v1057 = vadd.f32 %v1007, %v1041
      %v1058 = vadd.f32 %v1008, %v1042
      %v1059 = vadd.f32 %v1009, %v1043
      %v1060 = vadd.f32 %v1010, %v1044
      %v1061 = vadd.f32 %v1011, %v1045
      %v1062 = vadd.f32 %v1012, %v1046
      %v1063 = vadd.f32 %v1013, %v1047
      %v1064 = vadd.f32 %v1014, %v1048
      %v1065 = vadd.f32 %v1015, %v1049
      %v1066 = vadd.f32 %v1016, %v1050
      %v1067 = vadd.f32 %v1017, %v1051
      %v1068 = vadd.f32 %v1018, %v1052
      %v1069 = vadd.f32 %v1019, %v1053
      %v1070 = vadd.f32 %v1020, %v1054
      %v1071 = vadd.f32 %v1021, %v1055
      %v1072 = vld [vmem:[%s971 + $0x2] sm:$0xff]
      %v1073 = vld [vmem:[%s971 + $0xa] sm:$0xff]
      %v1074 = vld [vmem:[%s971 + $0x1a] sm:$0xff]
      %v1075 = vld [vmem:[%s971 + $0x22] sm:$0xff]
      %v1076 = vld [vmem:[%s971 + $0x32] sm:$0xff]
      %v1077 = vld [vmem:[%s971 + $0x3a] sm:$0xff]
      %v1078 = vld [vmem:[%s971 + $0x4a] sm:$0xff]
      %v1079 = vld [vmem:[%s971 + $0x52] sm:$0xff]
      %v1080 = vld [vmem:[%s971 + $0x62] sm:$0xff]
      %v1081 = vld [vmem:[%s971 + $0x6a] sm:$0xff]
      %v1082 = vld [vmem:[%s971 + $0x7a] sm:$0xff]
      %v1083 = vld [vmem:[%s971 + $0x82] sm:$0xff]
      %v1084 = vld [vmem:[%s971 + $0x92] sm:$0xff]
      %v1085 = vld [vmem:[%s971 + $0x9a] sm:$0xff]
      %v1086 = vld [vmem:[%s971 + $0xaa] sm:$0xff]
      %v1087 = vld [vmem:[%s971 + $0xb2] sm:$0xff]
      %v1088 = vld [vmem:[%s4 + $0x8] sm:$0x1]
      %v1089 = vperm.slane %v1088, 0
      %v1090 = vmul.f32 %v1072, %v1089
      %v1091 = vmul.f32 %v1073, %v1089
      %v1092 = vmul.f32 %v1074, %v1089
      %v1093 = vmul.f32 %v1075, %v1089
      %v1094 = vmul.f32 %v1076, %v1089
      %v1095 = vmul.f32 %v1077, %v1089
      %v1096 = vmul.f32 %v1078, %v1089
      %v1097 = vmul.f32 %v1079, %v1089
      %v1098 = vmul.f32 %v1080, %v1089
      %v1099 = vmul.f32 %v1081, %v1089
      %v1100 = vmul.f32 %v1082, %v1089
      %v1101 = vmul.f32 %v1083, %v1089
      %v1102 = vmul.f32 %v1084, %v1089
      %v1103 = vmul.f32 %v1085, %v1089
      %v1104 = vmul.f32 %v1086, %v1089
      %v1105 = vmul.f32 %v1087, %v1089
      %v1106 = vadd.f32 %v1056, %v1090
      %v1107 = vadd.f32 %v1057, %v1091
      %v1108 = vadd.f32 %v1058, %v1092
      %v1109 = vadd.f32 %v1059, %v1093
      %v1110 = vadd.f32 %v1060, %v1094
      %v1111 = vadd.f32 %v1061, %v1095
      %v1112 = vadd.f32 %v1062, %v1096
      %v1113 = vadd.f32 %v1063, %v1097
      %v1114 = vadd.f32 %v1064, %v1098
      %v1115 = vadd.f32 %v1065, %v1099
      %v1116 = vadd.f32 %v1066, %v1100
      %v1117 = vadd.f32 %v1067, %v1101
      %v1118 = vadd.f32 %v1068, %v1102
      %v1119 = vadd.f32 %v1069, %v1103
      %v1120 = vadd.f32 %v1070, %v1104
      %v1121 = vadd.f32 %v1071, %v1105
      %v1122 = vld [vmem:[%s5] sm:$0x1]
      %v1124 = vperm.slane %v1122, 0
      %v1126 = vmul.f32 %v1106, %v1124
      %v1127 = vmul.f32 %v1107, %v1124
      %v1128 = vmul.f32 %v1108, %v1124
      %v1129 = vmul.f32 %v1109, %v1124
      %v1130 = vmul.f32 %v1110, %v1124
      %v1131 = vmul.f32 %v1111, %v1124
      %v1132 = vmul.f32 %v1112, %v1124
      %v1133 = vmul.f32 %v1113, %v1124
      %v1134 = vmul.f32 %v1114, %v1124
      %v1135 = vmul.f32 %v1115, %v1124
      %v1136 = vmul.f32 %v1116, %v1124
      %v1137 = vmul.f32 %v1117, %v1124
      %v1138 = vmul.f32 %v1118, %v1124
      %v1139 = vmul.f32 %v1119, %v1124
      %v1140 = vmul.f32 %v1120, %v1124
      %v1141 = vmul.f32 %v1121, %v1124
      %v1142 = vld [vmem:[%s6] sm:$0x1]
      %v1144 = vperm.slane %v1142, 0
      %v1146 = vadd.f32 %v1126, %v1144
      %v1147 = vadd.f32 %v1127, %v1144
      %v1148 = vadd.f32 %v1128, %v1144
      %v1149 = vadd.f32 %v1129, %v1144
      %v1150 = vadd.f32 %v1130, %v1144
      %v1151 = vadd.f32 %v1131, %v1144
      %v1152 = vadd.f32 %v1132, %v1144
      %v1153 = vadd.f32 %v1133, %v1144
      %v1154 = vadd.f32 %v1134, %v1144
      %v1155 = vadd.f32 %v1135, %v1144
      %v1156 = vadd.f32 %v1136, %v1144
      %v1157 = vadd.f32 %v1137, %v1144
      %v1158 = vadd.f32 %v1138, %v1144
      %v1159 = vadd.f32 %v1139, %v1144
      %v1160 = vadd.f32 %v1140, %v1144
      %v1161 = vadd.f32 %v1141, %v1144
      %v1162 = vpack.c.bf16 %v1147, %v1146
      %v1163 = vpack.c.bf16 %v1149, %v1148
      %v1164 = vpack.c.bf16 %v1151, %v1150
      %v1165 = vpack.c.bf16 %v1153, %v1152
      %v1166 = vpack.c.bf16 %v1155, %v1154
      %v1167 = vpack.c.bf16 %v1157, %v1156
      %v1168 = vpack.c.bf16 %v1159, %v1158
      %v1169 = vpack.c.bf16 %v1161, %v1160
      %v1170 = vld [vmem:[%s7] sm:$0xf]
      %v1172 = vsel %vm391, %v1162, 0
      %v1175 = vsel %vm391, %v1163, 0
      %v1178 = vsel %vm391, %v1164, 0
      %v1181 = vsel %vm391, %v1165, 0
      %v1184 = vsel %vm391, %v1166, 0
      %v1187 = vsel %vm391, %v1167, 0
      %v1190 = vsel %vm391, %v1168, 0
      %v1193 = vsel %vm391, %v1169, 0
      %vm1195 = vcmask 1043456
      %v1197 = vsel %vm1195, %v1170, 0
      %1199 = vmatpush.bf16.msra.mxu0 0
      %1200 = vmatpush.bf16.msra.mxu0 0
      %1201 = vmatpush.bf16.msra.mxu0 0
      %1202 = vmatpush.bf16.msra.mxu0 0
      %1203 = vmatpush.bf16.msra.mxu0 0
      %1204 = vmatpush.bf16.msra.mxu0 0
      %1205 = vmatpush.bf16.msra.mxu0 0
      %1206 = vmatpush.bf16.msra.mxu0 %v1197
      %1207 = vmatmul.bf16.gmra.mxu0 %v1172
      %v1208 = vpop.f32.mrf.mxu0
      %v1209 = vadd.f32 0.0, %v1208
      %v1210 = vpop.f32.mrf.mxu0
      %v1211 = vadd.f32 0.0, %v1210
      %1212 = vmatmul.bf16.gmra.mxu0 %v1175
      %v1213 = vpop.f32.mrf.mxu0
      %v1214 = vadd.f32 0.0, %v1213
      %v1215 = vpop.f32.mrf.mxu0
      %v1216 = vadd.f32 0.0, %v1215
      %1217 = vmatmul.bf16.gmra.mxu0 %v1178
      %v1218 = vpop.f32.mrf.mxu0
      %v1219 = vadd.f32 0.0, %v1218
      %v1220 = vpop.f32.mrf.mxu0
      %v1221 = vadd.f32 0.0, %v1220
      %1222 = vmatmul.bf16.gmra.mxu0 %v1181
      %v1223 = vpop.f32.mrf.mxu0
      %v1224 = vadd.f32 0.0, %v1223
      %v1225 = vpop.f32.mrf.mxu0
      %v1226 = vadd.f32 0.0, %v1225
      %1227 = vmatmul.bf16.gmra.mxu0 %v1184
      %v1228 = vpop.f32.mrf.mxu0
      %v1229 = vadd.f32 0.0, %v1228
      %v1230 = vpop.f32.mrf.mxu0
      %v1231 = vadd.f32 0.0, %v1230
      %1232 = vmatmul.bf16.gmra.mxu0 %v1187
      %v1233 = vpop.f32.mrf.mxu0
      %v1234 = vadd.f32 0.0, %v1233
      %v1235 = vpop.f32.mrf.mxu0
      %v1236 = vadd.f32 0.0, %v1235
      %1237 = vmatmul.bf16.gmra.mxu0 %v1190
      %v1238 = vpop.f32.mrf.mxu0
      %v1239 = vadd.f32 0.0, %v1238
      %v1240 = vpop.f32.mrf.mxu0
      %v1241 = vadd.f32 0.0, %v1240
      %1242 = vmatmul.bf16.gmra.mxu0 %v1193
      %v1243 = vpop.f32.mrf.mxu0
      %v1244 = vadd.f32 0.0, %v1243
      %v1245 = vpop.f32.mrf.mxu0
      %v1246 = vadd.f32 0.0, %v1245
      %1247 = vdwg.mxu0
      %v1248 = vld [vmem:[%s8] sm:$0x1]
      %v1250 = vperm.slane %v1248, 0
      %v1252 = vmul.f32 %v1209, %v1250
      %v1253 = vmul.f32 %v1211, %v1250
      %v1254 = vmul.f32 %v1214, %v1250
      %v1255 = vmul.f32 %v1216, %v1250
      %v1256 = vmul.f32 %v1219, %v1250
      %v1257 = vmul.f32 %v1221, %v1250
      %v1258 = vmul.f32 %v1224, %v1250
      %v1259 = vmul.f32 %v1226, %v1250
      %v1260 = vmul.f32 %v1229, %v1250
      %v1261 = vmul.f32 %v1231, %v1250
      %v1262 = vmul.f32 %v1234, %v1250
      %v1263 = vmul.f32 %v1236, %v1250
      %v1264 = vmul.f32 %v1239, %v1250
      %v1265 = vmul.f32 %v1241, %v1250
      %v1266 = vmul.f32 %v1244, %v1250
      %v1267 = vmul.f32 %v1246, %v1250
      %v1268 = vld [vmem:[%s9] sm:$0x1]
      %v1270 = vperm.slane %v1268, 0
      %v1272 = vadd.f32 %v1252, %v1270
      %v1273 = vadd.f32 %v1253, %v1270
      %v1274 = vadd.f32 %v1254, %v1270
      %v1275 = vadd.f32 %v1255, %v1270
      %v1276 = vadd.f32 %v1256, %v1270
      %v1277 = vadd.f32 %v1257, %v1270
      %v1278 = vadd.f32 %v1258, %v1270
      %v1279 = vadd.f32 %v1259, %v1270
      %v1280 = vadd.f32 %v1260, %v1270
      %v1281 = vadd.f32 %v1261, %v1270
      %v1282 = vadd.f32 %v1262, %v1270
      %v1283 = vadd.f32 %v1263, %v1270
      %v1284 = vadd.f32 %v1264, %v1270
      %v1285 = vadd.f32 %v1265, %v1270
      %v1286 = vadd.f32 %v1266, %v1270
      %v1287 = vadd.f32 %v1267, %v1270
      %v1288 = vmax.f32 %v1272, 0.0
      %v1289 = vmax.f32 %v1273, 0.0
      %v1290 = vmax.f32 %v1274, 0.0
      %v1291 = vmax.f32 %v1275, 0.0
      %v1292 = vmax.f32 %v1276, 0.0
      %v1293 = vmax.f32 %v1277, 0.0
      %v1294 = vmax.f32 %v1278, 0.0
      %v1295 = vmax.f32 %v1279, 0.0
      %v1296 = vmax.f32 %v1280, 0.0
      %v1297 = vmax.f32 %v1281, 0.0
      %v1298 = vmax.f32 %v1282, 0.0
      %v1299 = vmax.f32 %v1283, 0.0
      %v1300 = vmax.f32 %v1284, 0.0
      %v1301 = vmax.f32 %v1285, 0.0
      %v1302 = vmax.f32 %v1286, 0.0
      %v1303 = vmax.f32 %v1287, 0.0
      %1304 = vst.msk [vmem:[%s383] sm:$0xff] %vm391, %v567
      %1305 = vst.msk [vmem:[%s383 + $0x8] sm:$0xff] %vm391, %v568
      %1306 = vst.msk [vmem:[%s383 + $0x10] sm:$0xff] %vm391, %v569
      %1307 = vst.msk [vmem:[%s383 + $0x18] sm:$0xff] %vm391, %v570
      %1308 = vst.msk [vmem:[%s383 + $0x20] sm:$0xff] %vm391, %v571
      %1309 = vst.msk [vmem:[%s383 + $0x28] sm:$0xff] %vm391, %v572
      %1310 = vst.msk [vmem:[%s383 + $0x30] sm:$0xff] %vm391, %v573
      %1311 = vst.msk [vmem:[%s383 + $0x38] sm:$0xff] %vm391, %v574
      %1312 = vst.msk [vmem:[%s383 + $0x40] sm:$0xff] %vm391, %v575
      %1313 = vst.msk [vmem:[%s383 + $0x48] sm:$0xff] %vm391, %v576
      %1314 = vst.msk [vmem:[%s383 + $0x50] sm:$0xff] %vm391, %v577
      %1315 = vst.msk [vmem:[%s383 + $0x58] sm:$0xff] %vm391, %v578
      %1316 = vst.msk [vmem:[%s383 + $0x60] sm:$0xff] %vm391, %v579
      %1317 = vst.msk [vmem:[%s383 + $0x68] sm:$0xff] %vm391, %v580
      %1318 = vst.msk [vmem:[%s383 + $0x70] sm:$0xff] %vm391, %v581
      %1319 = vst.msk [vmem:[%s383 + $0x78] sm:$0xff] %vm391, %v582
      %1336 = vrot.lane.b32.xlu0 %v1288, 8
      %v1337 = vpop.permute.xlu0 %1336
      %1338 = vrot.lane.b32.xlu0 %v1289, 8
      %v1339 = vpop.permute.xlu0 %1338
      %1340 = vrot.lane.b32.xlu0 %v1290, 8
      %v1341 = vpop.permute.xlu0 %1340
      %1342 = vrot.lane.b32.xlu0 %v1291, 8
      %v1343 = vpop.permute.xlu0 %1342
      %1344 = vrot.lane.b32.xlu0 %v1292, 8
      %v1345 = vpop.permute.xlu0 %1344
      %1346 = vrot.lane.b32.xlu0 %v1293, 8
      %v1347 = vpop.permute.xlu0 %1346
      %1348 = vrot.lane.b32.xlu0 %v1294, 8
      %v1349 = vpop.permute.xlu0 %1348
      %1350 = vrot.lane.b32.xlu0 %v1295, 8
      %v1351 = vpop.permute.xlu0 %1350
      %1352 = vrot.lane.b32.xlu0 %v1296, 8
      %v1353 = vpop.permute.xlu0 %1352
      %1354 = vrot.lane.b32.xlu0 %v1297, 8
      %v1355 = vpop.permute.xlu0 %1354
      %1356 = vrot.lane.b32.xlu0 %v1298, 8
      %v1357 = vpop.permute.xlu0 %1356
      %1358 = vrot.lane.b32.xlu0 %v1299, 8
      %v1359 = vpop.permute.xlu0 %1358
      %1360 = vrot.lane.b32.xlu0 %v1300, 8
      %v1361 = vpop.permute.xlu0 %1360
      %1362 = vrot.lane.b32.xlu0 %v1301, 8
      %v1363 = vpop.permute.xlu0 %1362
      %1364 = vrot.lane.b32.xlu0 %v1302, 8
      %v1365 = vpop.permute.xlu0 %1364
      %1366 = vrot.lane.b32.xlu0 %v1303, 8
      %v1367 = vpop.permute.xlu0 %1366
      %vm1384 = vcmask 130112
      %1385 = vst.msk [vmem:[%s383] sm:$0xff] %vm1384, %v1337
      %1386 = vst.msk [vmem:[%s383 + $0x8] sm:$0xff] %vm1384, %v1339
      %1387 = vst.msk [vmem:[%s383 + $0x10] sm:$0xff] %vm1384, %v1341
      %1388 = vst.msk [vmem:[%s383 + $0x18] sm:$0xff] %vm1384, %v1343
      %1389 = vst.msk [vmem:[%s383 + $0x20] sm:$0xff] %vm1384, %v1345
      %1390 = vst.msk [vmem:[%s383 + $0x28] sm:$0xff] %vm1384, %v1347
      %1391 = vst.msk [vmem:[%s383 + $0x30] sm:$0xff] %vm1384, %v1349
      %1392 = vst.msk [vmem:[%s383 + $0x38] sm:$0xff] %vm1384, %v1351
      %1393 = vst.msk [vmem:[%s383 + $0x40] sm:$0xff] %vm1384, %v1353
      %1394 = vst.msk [vmem:[%s383 + $0x48] sm:$0xff] %vm1384, %v1355
      %1395 = vst.msk [vmem:[%s383 + $0x50] sm:$0xff] %vm1384, %v1357
      %1396 = vst.msk [vmem:[%s383 + $0x58] sm:$0xff] %vm1384, %v1359
      %1397 = vst.msk [vmem:[%s383 + $0x60] sm:$0xff] %vm1384, %v1361
      %1398 = vst.msk [vmem:[%s383 + $0x68] sm:$0xff] %vm1384, %v1363
      %1399 = vst.msk [vmem:[%s383 + $0x70] sm:$0xff] %vm1384, %v1365
      %1400 = vst.msk [vmem:[%s383 + $0x78] sm:$0xff] %vm1384, %v1367
      %v1401 = vld [vmem:[%s383] sm:$0xff]
      %v1402 = vld [vmem:[%s383 + $0x8] sm:$0xff]
      %v1403 = vld [vmem:[%s383 + $0x10] sm:$0xff]
      %v1404 = vld [vmem:[%s383 + $0x18] sm:$0xff]
      %v1405 = vld [vmem:[%s383 + $0x20] sm:$0xff]
      %v1406 = vld [vmem:[%s383 + $0x28] sm:$0xff]
      %v1407 = vld [vmem:[%s383 + $0x30] sm:$0xff]
      %v1408 = vld [vmem:[%s383 + $0x38] sm:$0xff]
      %v1409 = vld [vmem:[%s383 + $0x40] sm:$0xff]
      %v1410 = vld [vmem:[%s383 + $0x48] sm:$0xff]
      %v1411 = vld [vmem:[%s383 + $0x50] sm:$0xff]
      %v1412 = vld [vmem:[%s383 + $0x58] sm:$0xff]
      %v1413 = vld [vmem:[%s383 + $0x60] sm:$0xff]
      %v1414 = vld [vmem:[%s383 + $0x68] sm:$0xff]
      %v1415 = vld [vmem:[%s383 + $0x70] sm:$0xff]
      %v1416 = vld [vmem:[%s383 + $0x78] sm:$0xff]
      %v1417 = vadd.f32 %v1401, %v425
      %v1418 = vadd.f32 %v1402, %v426
      %v1419 = vadd.f32 %v1403, %v427
      %v1420 = vadd.f32 %v1404, %v428
      %v1421 = vadd.f32 %v1405, %v429
      %v1422 = vadd.f32 %v1406, %v430
      %v1423 = vadd.f32 %v1407, %v431
      %v1424 = vadd.f32 %v1408, %v432
      %v1425 = vadd.f32 %v1409, %v433
      %v1426 = vadd.f32 %v1410, %v434
      %v1427 = vadd.f32 %v1411, %v435
      %v1428 = vadd.f32 %v1412, %v436
      %v1429 = vadd.f32 %v1413, %v437
      %v1430 = vadd.f32 %v1414, %v438
      %v1431 = vadd.f32 %v1415, %v439
      %v1432 = vadd.f32 %v1416, %v440
      %1433 = vst.msk [vmem:[%s383] sm:$0xff] %vm455, %v1417
      %1434 = vst.msk [vmem:[%s383 + $0x8] sm:$0xff] %vm455, %v1418
      %1435 = vst.msk [vmem:[%s383 + $0x10] sm:$0xff] %vm455, %v1419
      %1436 = vst.msk [vmem:[%s383 + $0x18] sm:$0xff] %vm455, %v1420
      %1437 = vst.msk [vmem:[%s383 + $0x20] sm:$0xff] %vm455, %v1421
      %1438 = vst.msk [vmem:[%s383 + $0x28] sm:$0xff] %vm455, %v1422
      %1439 = vst.msk [vmem:[%s383 + $0x30] sm:$0xff] %vm455, %v1423
      %1440 = vst.msk [vmem:[%s383 + $0x38] sm:$0xff] %vm455, %v1424
      %1441 = vst.msk [vmem:[%s383 + $0x40] sm:$0xff] %vm455, %v1425
      %1442 = vst.msk [vmem:[%s383 + $0x48] sm:$0xff] %vm455, %v1426
      %1443 = vst.msk [vmem:[%s383 + $0x50] sm:$0xff] %vm455, %v1427
      %1444 = vst.msk [vmem:[%s383 + $0x58] sm:$0xff] %vm455, %v1428
      %1445 = vst.msk [vmem:[%s383 + $0x60] sm:$0xff] %vm455, %v1429
      %1446 = vst.msk [vmem:[%s383 + $0x68] sm:$0xff] %vm455, %v1430
      %1447 = vst.msk [vmem:[%s383 + $0x70] sm:$0xff] %vm455, %v1431
      %1448 = vst.msk [vmem:[%s383 + $0x78] sm:$0xff] %vm455, %v1432
      %s1449 = smul.u32 8, %s26
      %p1450 = scmp.lt.s32.totalorder %s25, 1
      %s1451 = scalar_select %p1450, %s25, 1
      %p1452 = scmp.lt.s32.totalorder %s1449, 15
      %s1453 = scalar_select %p1452, %s1449, 15
      %s1454 = smul.addr %s1453, 2
      %s1455 = smul.addr %s1451, 32
      %s1456 = sadd.s32 %s1454, %s1455
      %s1457 = smul.addr %s1456, 8
      %s1458 = scalar_lea.vmem %s10, %s1457
      // Predicated region
      $region69: #{shuffle_unit.1} parent=59 // pred_check
        %p1459 = pneg %p268
      $region70: #{shuffle_unit.1} parent=59 // pred_check_branch
        %1461 = sbr.rel (%p1459) target = $region72
      $region71: #{shuffle_unit.1} parent=59 // pred_region
        %s1462 = smul.u32 8, %s26
      $region72: #{shuffle_unit.1} parent=59 // pred_fallthru
        _
    $region60: #{shuffle_unit.1} parent=5 // pred_fallthru
      _
    %p1463 = scmp.le.s32.totalorder 2, %s16
    // Predicated region
    $region73: #{shuffle_unit.1} parent=5 // pred_check
      %p1464 = pneg %p1463
    $region74: #{shuffle_unit.1} parent=5 // pred_check_branch
      %1466 = sbr.rel (%p1464) target = $region76
    $region75: #{shuffle_unit.1} parent=5 // pred_region
      %s1467 = ssub.s32 %s16, 2
      // Predicated region
      $region77: #{shuffle_unit.1} parent=75 // pred_check
        %p1468 = pneg %p274
      $region78: #{shuffle_unit.1} parent=75 // pred_check_branch
        %1470 = sbr.rel (%p1468) target = $region80
      $region79: #{shuffle_unit.1} parent=75 // pred_region
        %s1471 = smul.u32 8, %s28
        %p1472 = scmp.lt.s32.totalorder %s27, 1
        %s1473 = scalar_select %p1472, %s27, 1
        %p1474 = scmp.lt.s32.totalorder %s1471, 15
        %s1475 = scalar_select %p1474, %s1471, 15
        %s1476 = smul.addr %s1475, 2
        %s1477 = smul.addr %s1473, 32
        %s1478 = sadd.s32 %s1476, %s1477
        %s1479 = smul.addr %s1478, 8
        %s1480 = scalar_lea.vmem %s10, %s1479
      $region80: #{shuffle_unit.1} parent=75 // pred_fallthru
        _
    $region76: #{shuffle_unit.1} parent=5 // pred_fallthru
      _
  $region6: #{shuffle_unit.1} parent=0 // loop_footer
    %s20 = sadd.s32 1, %s16
  $region7: #{shuffle_unit.1} parent=0 // loop_footer_branch
    %15 = sbr.rel target = $region3
  $region8: #{shuffle_unit.1} parent=0 // loop_exit
    _

</llo_original>
